<compile_context>
chip_gen: v5e
topology: v5e:2x2
jax: 0.10.0
libtpu: 0.0.40
codegen_flags: <defaults>
</compile_context>

<pallas_src>
import functools

import jax
import jax.numpy as jnp
from jax.experimental import pallas as pl
from jax.experimental.pallas import tpu as pltpu


def _pick_tile(n, candidates=(512, 256, 128, 64, 32, 16, 8)):
    """Largest candidate that divides n leaving >=2 blocks; else any divisor; else n."""
    for c in candidates:
        if n % c == 0 and n // c >= 2:
            return c
    for c in candidates:
        if n % c == 0:
            return c
    return n


# --------------------------------------------------------------------------
# Kernel 1: fused (BN+ReLU on input) -> matmul -> (affine [+ReLU] epilogue).
# Used for conv0 (im2col), all 1x1 bottleneck convs, and transition convs.
# K (contraction dim) is kept whole in each block (K <= 1024), so there is no
# reduction grid axis and no accumulator carry.
# --------------------------------------------------------------------------
def _fused_mm_kernel(x_ref, si_ref, bi_ref, w_ref, so_ref, bo_ref, o_ref,
                     *, in_bn, out_relu):
    x = x_ref[...]                                            # (TM, K) bf16
    if in_bn:
        a = jnp.maximum(x.astype(jnp.float32) * si_ref[...] + bi_ref[...], 0.0)
        a = a.astype(jnp.bfloat16)
    else:
        a = x
    y = jnp.dot(a, w_ref[...], preferred_element_type=jnp.float32)
    y = y * so_ref[...] + bo_ref[...]
    if out_relu:
        y = jnp.maximum(y, 0.0)
    o_ref[...] = y.astype(o_ref.dtype)


@functools.partial(jax.jit, static_argnames=("in_bn", "out_relu"))
def _fused_matmul(x, si, bi, w, so, bo, *, in_bn, out_relu):
    m, k = x.shape
    n_out = w.shape[1]
    tm = _pick_tile(m)
    tn = _pick_tile(n_out, (256, 128))
    kernel = functools.partial(_fused_mm_kernel, in_bn=in_bn, out_relu=out_relu)
    return pl.pallas_call(
        kernel,
        grid=(m // tm, n_out // tn),
        in_specs=[
            pl.BlockSpec((tm, k), lambda i, j: (i, 0)),
            pl.BlockSpec((1, k), lambda i, j: (0, 0)),
            pl.BlockSpec((1, k), lambda i, j: (0, 0)),
            pl.BlockSpec((k, tn), lambda i, j: (0, j)),
            pl.BlockSpec((1, tn), lambda i, j: (0, j)),
            pl.BlockSpec((1, tn), lambda i, j: (0, j)),
        ],
        out_specs=pl.BlockSpec((tm, tn), lambda i, j: (i, j)),
        out_shape=jax.ShapeDtypeStruct((m, n_out), jnp.bfloat16),
        compiler_params=pltpu.CompilerParams(
            dimension_semantics=("parallel", "parallel")),
    )(x, si, bi, w, so, bo)


# --------------------------------------------------------------------------
# Kernel 2: 3x3 stride-1 pad-1 conv, one image per grid step, NO im2col.
# The zero-padded per-image slab is flattened so that tap (di, dj) is a
# constant row offset di*Wp + dj; nine offset-slice matmuls accumulate into an
# f32 VMEM scratch. Garbage columns (w >= W) are discarded in the wrapper.
# --------------------------------------------------------------------------
def _conv3x3_kernel(x_ref, w_ref, o_ref, acc_ref, *, hw_out, wp):
    acc_ref[...] = jnp.dot(x_ref[0:hw_out, :], w_ref[0],
                           preferred_element_type=jnp.float32)
    for di in range(3):
        for dj in range(3):
            if di == 0 and dj == 0:
                continue
            off = di * wp + dj
            acc_ref[...] += jnp.dot(x_ref[off:off + hw_out, :],
                                    w_ref[di * 3 + dj],
                                    preferred_element_type=jnp.float32)
    o_ref[...] = acc_ref[...].astype(o_ref.dtype)


@functools.partial(jax.jit, static_argnames=("n", "h", "w"))
def _conv3x3_same(x2d, w9, *, n, h, w):
    """x2d: (n*h*w, cin) bf16 (activation already applied); w9: (9, cin, cout)."""
    cin = x2d.shape[1]
    cout = w9.shape[2]
    wp = w + 2
    hw_out = h * wp                         # only cols [0, w) are valid
    rows = (h + 3) * wp                     # 1 top + 2 bottom pad rows (slab slack)
    xp = jnp.pad(x2d.reshape(n, h, w, cin), ((0, 0), (1, 2), (1, 1), (0, 0)))
    xs = xp.reshape(n, rows, cin)
    kernel = functools.partial(_conv3x3_kernel, hw_out=hw_out, wp=wp)
    y = pl.pallas_call(
        kernel,
        grid=(n,),
        in_specs=[
            pl.BlockSpec((None, rows, cin), lambda i: (i, 0, 0)),
            pl.BlockSpec((9, cin, cout), lambda i: (0, 0, 0)),
        ],
        out_specs=pl.BlockSpec((None, hw_out, cout), lambda i: (i, 0, 0)),
        out_shape=jax.ShapeDtypeStruct((n, hw_out, cout), jnp.bfloat16),
        scratch_shapes=[pltpu.VMEM((hw_out, cout), jnp.float32)],
        compiler_params=pltpu.CompilerParams(dimension_semantics=("parallel",)),
    )(xs, w9)
    y = y.reshape(n, h, wp, cout)[:, :, :w, :]
    return y.reshape(n * h * w, cout)


# --------------------------------------------------------------------------
# Kernel 3: reduction over a small stacked-window axis (max / mean pooling).
# --------------------------------------------------------------------------
def _stack_reduce_kernel(x_ref, o_ref, *, op, ntaps):
    acc = x_ref[0].astype(jnp.float32)
    for t in range(1, ntaps):
        v = x_ref[t].astype(jnp.float32)
        acc = jnp.maximum(acc, v) if op == "max" else acc + v
    if op == "mean":
        acc = acc * (1.0 / ntaps)
    o_ref[...] = acc.astype(o_ref.dtype)


def _stack_reduce(stacked, op):
    ntaps, m, c = stacked.shape
    tm = _pick_tile(m)
    kernel = functools.partial(_stack_reduce_kernel, op=op, ntaps=ntaps)
    return pl.pallas_call(
        kernel,
        grid=(m // tm,),
        in_specs=[pl.BlockSpec((ntaps, tm, c), lambda i: (0, i, 0))],
        out_specs=pl.BlockSpec((tm, c), lambda i: (i, 0)),
        out_shape=jax.ShapeDtypeStruct((m, c), jnp.bfloat16),
        compiler_params=pltpu.CompilerParams(dimension_semantics=("parallel",)),
    )(stacked)


@functools.partial(jax.jit, static_argnames=("n", "h", "w"))
def _maxpool_3x3_s2(x2d, *, n, h, w):
    c = x2d.shape[1]
    ho = (h + 2 - 3) // 2 + 1
    wo = (w + 2 - 3) // 2 + 1
    xp = jnp.pad(x2d.reshape(n, h, w, c), ((0, 0), (1, 1), (1, 1), (0, 0)),
                 constant_values=-jnp.inf)
    views = [xp[:, i:i + 2 * (ho - 1) + 1:2, j:j + 2 * (wo - 1) + 1:2, :]
             for i in range(3) for j in range(3)]
    stacked = jnp.stack(views, axis=0).reshape(9, n * ho * wo, c)
    return _stack_reduce(stacked, "max")


@functools.partial(jax.jit, static_argnames=("n", "h", "w"))
def _avgpool_2x2_s2(x2d, *, n, h, w):
    c = x2d.shape[1]
    ho, wo = h // 2, w // 2
    x4 = x2d.reshape(n, h, w, c)
    views = [x4[:, i::2, j::2, :] for i in range(2) for j in range(2)]
    stacked = jnp.stack(views, axis=0).reshape(4, n * ho * wo, c)
    return _stack_reduce(stacked, "mean")


# --------------------------------------------------------------------------
# Kernel 4: fused norm5 + ReLU + global average pool.
# --------------------------------------------------------------------------
def _gap_bn_relu_kernel(x_ref, s_ref, b_ref, o_ref):
    a = x_ref[...].astype(jnp.float32) * s_ref[...] + b_ref[...]
    a = jnp.maximum(a, 0.0)
    o_ref[...] = jnp.sum(a, axis=1) * (1.0 / x_ref.shape[1])


@functools.partial(jax.jit, static_argnames=("n", "hw"))
def _global_pool_bn_relu(x2d, scale, bias, *, n, hw):
    c = x2d.shape[1]
    x3 = x2d.reshape(n, hw, c)
    return pl.pallas_call(
        _gap_bn_relu_kernel,
        grid=(1,),
        in_specs=[pl.BlockSpec((n, hw, c), lambda i: (0, 0, 0)),
                  pl.BlockSpec((1, c), lambda i: (0, 0)),
                  pl.BlockSpec((1, c), lambda i: (0, 0))],
        out_specs=pl.BlockSpec((n, c), lambda i: (0, 0)),
        out_shape=jax.ShapeDtypeStruct((n, c), jnp.float32),
        compiler_params=pltpu.CompilerParams(dimension_semantics=("arbitrary",)),
    )(x3, scale, bias)


# --------------------------------------------------------------------------
# Stem conv0: 7x7 stride-2 pad-3 via im2col (3 input channels only), with the
# norm0+ReLU epilogue fused into the matmul kernel.
# --------------------------------------------------------------------------
@functools.partial(jax.jit, static_argnames=("n", "h", "w"))
def _conv0(x_nchw, w_col, s_out, b_out, *, n, h, w):
    k, stride, pad = 7, 2, 3
    x = jnp.transpose(x_nchw, (0, 2, 3, 1)).astype(jnp.bfloat16)   # NCHW -> NHWC
    cin = x.shape[-1]
    ho = (h + 2 * pad - k) // stride + 1
    wo = (w + 2 * pad - k) // stride + 1
    xp = jnp.pad(x, ((0, 0), (pad, pad), (pad, pad), (0, 0)))
    cols = [xp[:, i:i + stride * (ho - 1) + 1:stride,
               j:j + stride * (wo - 1) + 1:stride, :]
            for i in range(k) for j in range(k)]
    kdim = w_col.shape[0]                       # 256 (zero-padded from 7*7*3=147)
    cols.append(jnp.zeros((n, ho, wo, kdim - k * k * cin), jnp.bfloat16))
    patches = jnp.concatenate(cols, axis=-1).reshape(n * ho * wo, kdim)
    dummy = jnp.zeros((1, kdim), jnp.float32)
    return _fused_matmul(patches, dummy, dummy, w_col, s_out, b_out,
                         in_bn=False, out_relu=True)


# --------------------------------------------------------------------------
# DenseNet structure.
# --------------------------------------------------------------------------
def _bn_scale_bias(bn, eps=1e-5):
    # TODO(synk): eval-mode running statistics only; train-mode batch stats not
    # implemented.
    scale = bn["gamma"] / jnp.sqrt(bn["var"] + eps)
    bias = bn["beta"] - bn["mean"] * scale
    return (scale.reshape(1, -1).astype(jnp.float32),
            bias.reshape(1, -1).astype(jnp.float32))


def dense_layer(x2d, n, h, w, lp):
    s1, b1 = _bn_scale_bias(lp["norm1"])
    s2, b2 = _bn_scale_bias(lp["norm2"])
    # bottleneck = relu(bn2(conv1(relu(bn1(x))))) in a single Pallas kernel.
    bottleneck = _fused_matmul(x2d, s1, b1, lp["conv1"], s2, b2,
                               in_bn=True, out_relu=True)
    new_feats = _conv3x3_same(bottleneck, lp["conv2"], n=n, h=h, w=w)
    # TODO(synk): channel concat uses XLA (no in-place preallocated block buffer).
    return jnp.concatenate([x2d, new_feats], axis=1)


def transition_layer(x2d, n, h, w, tp):
    s, b = _bn_scale_bias(tp["norm"])
    cout = tp["conv"].shape[1]
    one = jnp.ones((1, cout), jnp.float32)
    zero = jnp.zeros((1, cout), jnp.float32)
    y = _fused_matmul(x2d, s, b, tp["conv"], one, zero,
                      in_bn=True, out_relu=False)
    return _avgpool_2x2_s2(y, n=n, h=h, w=w)


def densenet121_ce_forward(params, x_nchw):
    n, _, h, w = x_nchw.shape
    s0, b0 = _bn_scale_bias(params["norm0"])
    y = _conv0(x_nchw, params["conv0"], s0, b0, n=n, h=h, w=w)     # (n*h/2*w/2, 64)
    h, w = (h + 6 - 7) // 2 + 1, (w + 6 - 7) // 2 + 1
    y = _maxpool_3x3_s2(y, n=n, h=h, w=w)
    h, w = (h + 2 - 3) // 2 + 1, (w + 2 - 3) // 2 + 1
    for bi, block in enumerate(params["blocks"]):
        for lp in block:
            y = dense_layer(y, n, h, w, lp)
        if bi < len(params["transitions"]):
            y = transition_layer(y, n, h, w, params["transitions"][bi])
            h, w = h // 2, w // 2
    s5, b5 = _bn_scale_bias(params["norm5"])
    feats = _global_pool_bn_relu(y, s5, b5, n=n, hw=h * w)          # (n, 1024) f32
    # Tiny classifier (batch x 1024 x 3): plain XLA matmul.
    logits = jnp.dot(feats, params["classifier"]["w"]) + params["classifier"]["b"]
    return logits


# --------------------------------------------------------------------------
# Deterministic synthetic parameters (same shapes as torchvision densenet121
# with the classifier replaced by Linear(1024, nnClassCount + 1 = 3)).
# --------------------------------------------------------------------------
def init_densenet121_params(key, num_classes=3, growth=32, bn_size=4,
                            init_feat=64, block_config=(6, 12, 24, 16)):
    keys = iter(jax.random.split(key, 1024))

    def conv1x1_w(cin, cout):
        w = (jax.random.normal(next(keys), (cin, cout), jnp.float32)
             * jnp.sqrt(2.0 / cin))
        return w.astype(jnp.bfloat16)

    def conv3x3_w(cin, cout):
        w = (jax.random.normal(next(keys), (9, cin, cout), jnp.float32)
             * jnp.sqrt(2.0 / (9 * cin)))
        return w.astype(jnp.bfloat16)

    def conv0_w(cin, cout, k=7, kpad=256):
        w = (jax.random.normal(next(keys), (k * k * cin, cout), jnp.float32)
             * jnp.sqrt(2.0 / (k * k * cin)))
        w = jnp.pad(w, ((0, kpad - k * k * cin), (0, 0)))   # zero rows: no effect
        return w.astype(jnp.bfloat16)

    def bn_p(c):
        return dict(
            gamma=1.0 + 0.1 * jax.random.normal(next(keys), (c,), jnp.float32),
            beta=0.1 * jax.random.normal(next(keys), (c,), jnp.float32),
            mean=0.1 * jax.random.normal(next(keys), (c,), jnp.float32),
            var=1.0 + 0.1 * jnp.abs(
                jax.random.normal(next(keys), (c,), jnp.float32)),
        )

    params = dict(conv0=conv0_w(3, init_feat), norm0=bn_p(init_feat))
    blocks, transitions = [], []
    ch = init_feat
    for bi, n_layers in enumerate(block_config):
        block = []
        for _ in range(n_layers):
            block.append(dict(
                norm1=bn_p(ch),
                conv1=conv1x1_w(ch, bn_size * growth),
                norm2=bn_p(bn_size * growth),
                conv2=conv3x3_w(bn_size * growth, growth),
            ))
            ch += growth
        blocks.append(block)
        if bi != len(block_config) - 1:
            transitions.append(dict(norm=bn_p(ch), conv=conv1x1_w(ch, ch // 2)))
            ch //= 2
    params["blocks"] = blocks
    params["transitions"] = transitions
    params["norm5"] = bn_p(ch)               # ch == 1024
    params["classifier"] = dict(
        w=jax.random.normal(next(keys), (ch, num_classes), jnp.float32) * 0.02,
        b=jnp.zeros((num_classes,), jnp.float32),
    )
    return params


if __name__ == "__main__":
    root = jax.random.PRNGKey(0)
    pkey, xkey = jax.random.split(root)
    params = init_densenet121_params(pkey, num_classes=3)   # nnClassCount + 1
    x = jax.random.normal(xkey, (2, 3, 64, 64), jnp.float32)  # NCHW like PyTorch
    logits = densenet121_ce_forward(params, x)
    logits = jax.block_until_ready(logits)
    assert logits.shape == (2, 3)
    assert bool(jnp.all(jnp.isfinite(logits)))
    print("KERNEL_OK")
</pallas_src>

<mosaic_0001>
module attributes {stable_mosaic.version = 11 : i64} {
  func.func @_fused_mm_kernel(%arg0: i32, %arg1: i32, %arg2: memref<512x256xbf16, #tpu.memory_space<vmem>>, %arg3: memref<1x256xf32, #tpu.memory_space<vmem>>, %arg4: memref<1x256xf32, #tpu.memory_space<vmem>>, %arg5: memref<256x64xbf16, #tpu.memory_space<vmem>>, %arg6: memref<1x64xf32, #tpu.memory_space<vmem>>, %arg7: memref<1x64xf32, #tpu.memory_space<vmem>>, %arg8: memref<512x64xbf16, #tpu.memory_space<vmem>>) attributes {dimension_semantics = [#tpu.dimension_semantics<parallel>, #tpu.dimension_semantics<parallel>], iteration_bounds = array<i64: 4, 1>, scalar_prefetch = 0 : i64, scratch_operands = 0 : i64, tpu.core_type = #tpu.core_type<tc>, window_params = [{transform_indices = @transform_0, window_bounds = array<i64: 512, 256>}, {pipeline_mode = #tpu.pipeline_mode<synchronous>, transform_indices = @transform_1, window_bounds = array<i64: 1, 256>}, {pipeline_mode = #tpu.pipeline_mode<synchronous>, transform_indices = @transform_2, window_bounds = array<i64: 1, 256>}, {transform_indices = @transform_3, window_bounds = array<i64: 256, 64>}, {transform_indices = @transform_4, window_bounds = array<i64: 1, 64>}, {transform_indices = @transform_5, window_bounds = array<i64: 1, 64>}, {transform_indices = @transform_6, window_bounds = array<i64: 512, 64>}]} {
    %c0 = arith.constant 0 : index
    %c0_0 = arith.constant 0 : index
    %0 = vector.load %arg2[%c0, %c0_0] : memref<512x256xbf16, #tpu.memory_space<vmem>>, vector<512x256xbf16>
    %c0_1 = arith.constant 0 : index
    %c0_2 = arith.constant 0 : index
    %1 = vector.load %arg5[%c0_1, %c0_2] : memref<256x64xbf16, #tpu.memory_space<vmem>>, vector<256x64xbf16>
    %cst = arith.constant dense<0.000000e+00> : vector<512x64xf32>
    %2 = tpu.matmul %0, %1, %cst {dimension_numbers = #tpu.dot_dimension_numbers<[1], [0], [0], [1], [0, 0, 1, 1], [], []>} : vector<512x256xbf16>, vector<256x64xbf16>, vector<512x64xf32> -> vector<512x64xf32>
    %c0_3 = arith.constant 0 : index
    %c0_4 = arith.constant 0 : index
    %3 = vector.load %arg6[%c0_3, %c0_4] : memref<1x64xf32, #tpu.memory_space<vmem>>, vector<1x64xf32>
    %4 = vector.broadcast %3 : vector<1x64xf32> to vector<512x64xf32>
    %5 = arith.mulf %2, %4 : vector<512x64xf32>
    %c0_5 = arith.constant 0 : index
    %c0_6 = arith.constant 0 : index
    %6 = vector.load %arg7[%c0_5, %c0_6] : memref<1x64xf32, #tpu.memory_space<vmem>>, vector<1x64xf32>
    %7 = vector.broadcast %6 : vector<1x64xf32> to vector<512x64xf32>
    %8 = arith.addf %5, %7 : vector<512x64xf32>
    %cst_7 = arith.constant 0.000000e+00 : f32
    %9 = vector.broadcast %cst_7 : f32 to vector<512x64xf32>
    %10 = arith.maximumf %8, %9 : vector<512x64xf32>
    %11 = arith.truncf %10 : vector<512x64xf32> to vector<512x64xbf16>
    %c0_8 = arith.constant 0 : index
    %c0_9 = arith.constant 0 : index
    %12 = vector.load %arg8[%c0_8, %c0_9] : memref<512x64xbf16, #tpu.memory_space<vmem>>, vector<512x64xbf16>
    tpu.vector_store %arg8[%c0_8, %c0_9], %11 {strides = array<i32>} : memref<512x64xbf16, #tpu.memory_space<vmem>>, vector<512x64xbf16>,
    return
  }
  func.func @transform_0(%arg0: i32, %arg1: i32) -> (i32, i32) {
    %c0_i32 = arith.constant 0 : i32
    %c0_i32_0 = arith.constant 0 : i32
    return %arg0, %c0_i32 : i32, i32
  }
  func.func @transform_1(%arg0: i32, %arg1: i32) -> (i32, i32) {
    %c0_i32 = arith.constant 0 : i32
    %c0_i32_0 = arith.constant 0 : i32
    %c0_i32_1 = arith.constant 0 : i32
    return %c0_i32, %c0_i32_0 : i32, i32
  }
  func.func @transform_2(%arg0: i32, %arg1: i32) -> (i32, i32) {
    %c0_i32 = arith.constant 0 : i32
    %c0_i32_0 = arith.constant 0 : i32
    %c0_i32_1 = arith.constant 0 : i32
    return %c0_i32, %c0_i32_0 : i32, i32
  }
  func.func @transform_3(%arg0: i32, %arg1: i32) -> (i32, i32) {
    %c0_i32 = arith.constant 0 : i32
    %c0_i32_0 = arith.constant 0 : i32
    return %c0_i32, %arg1 : i32, i32
  }
  func.func @transform_4(%arg0: i32, %arg1: i32) -> (i32, i32) {
    %c0_i32 = arith.constant 0 : i32
    %c0_i32_0 = arith.constant 0 : i32
    return %c0_i32, %arg1 : i32, i32
  }
  func.func @transform_5(%arg0: i32, %arg1: i32) -> (i32, i32) {
    %c0_i32 = arith.constant 0 : i32
    %c0_i32_0 = arith.constant 0 : i32
    return %c0_i32, %arg1 : i32, i32
  }
  func.func @transform_6(%arg0: i32, %arg1: i32) -> (i32, i32) {
    %c0_i32 = arith.constant 0 : i32
    return %arg0, %arg1 : i32, i32
  }
}

</mosaic_0001>

<llo_original>
// kernel: _fused_matmul.1
$region0: #{_fused_matmul.1}
  #allocation0 [shape = 'u32[]', space=smem, size = 0x4, offset = 0x4, fixed_abs, tag = 'smem constant byte address 0x4 - core index']
  #allocation1 [shape = 'u32[72,128]{1,0:T(1,128)}', space=vmem, size = 0x9000, scoped, tag = 'internal scratch']
  %s0 = inlined_call_operand.hbm [shape: bf16[2048,256], index: 0, kind: input, shape index: {}]
  %s1 = inlined_call_operand.vmem [shape: f32[1,256], index: 1, kind: input, shape index: {}]
  %s2 = inlined_call_operand.vmem [shape: f32[1,256], index: 2, kind: input, shape index: {}]
  %s3 = inlined_call_operand.vmem [shape: bf16[256,64], index: 3, kind: input, shape index: {}]
  %s4 = inlined_call_operand.vmem [shape: f32[1,64], index: 4, kind: input, shape index: {}]
  %s5 = inlined_call_operand.vmem [shape: f32[1,64], index: 5, kind: input, shape index: {}]
  %s6 = inlined_call_operand.vmem [shape: bf16[2048,64], index: 6, kind: output, shape index: {}]
  %s7 = sld [smem:[#allocation0]]
  $region61: #{_fused_matmul.1} parent=0
    _
  %s9 = ssub.s32 1, %s7
  %s10 = scalar_select 0, %s9, %s7
  $region1: #{_fused_matmul.1} parent=0
    #allocation2 [shape = 'u8[524288]{0}', space=vmem, size = 0x80000, scoped, tag = 'input window, operand 0']
    #allocation3 [shape = 's32[2]{0}', space=sflag, size = 0x8, scoped, tag = 'scoped memory for _fused_matmul.1']
    %11 = vsyncpa [#allocation3], 0
    %s12 = scalar_lea.sflag [#allocation3], 1
    %13 = vsyncpa %s12, 0
    loop: start=0, step=1, limit=6
    $region2: #{_fused_matmul.1} parent=1 // loop_pre_header
      _
    $region3: #{_fused_matmul.1} parent=1 // loop_header
      %s15 = sphi 0, %s19
      %p16 = scmp.ge.s32.totalorder %s15, 6
      %s22 = sphi 0, %s34
      %s23 = sphi 0, %s30
      %s24 = sphi 0, %s22
      %s25 = sphi 0, %s23
      %s26 = sphi 0, %s24
      %s27 = sphi 0, %s25
      %s37 = sphi 0, %s39
      %s40 = sphi 0, %s37
      %s41 = sphi 0, %s40
      %s57 = sphi 0, %s41
      %s61 = sphi 0, %s61
      %s63 = sphi 0, %s61
      %s64 = sphi 0, %s63
      %s78 = sphi 0, %s64
      %s82 = sphi 0, %s82
      %s84 = sphi 0, %s82
      %s85 = sphi 0, %s84
      %s99 = sphi 0, %s85
      %s105 = sphi 0, %s107
      %s108 = sphi 0, %s105
      %s109 = sphi 0, %s108
      %s125 = sphi 0, %s109
      %s131 = sphi 0, %s133
      %s134 = sphi 0, %s131
      %s135 = sphi 0, %s134
      %s151 = sphi 0, %s135
      %s157 = sphi 0, %s159
      %s160 = sphi 0, %s157
      %s161 = sphi 0, %s160
      %s177 = sphi 0, %s161
      %s185 = sphi 0, %s187
      %s188 = sphi 0, %s185
      %s189 = sphi 0, %s188
      %s205 = sphi 0, %s189
    $region4: #{_fused_matmul.1} parent=1 // loop_header_branch
      %18 = sbr.rel (%p16) target = $region8
    $region5: #{_fused_matmul.1} parent=1 // loop_body
      %s20 = ssub.s32 %s15, 1
      %s21 = ssub.s32 %s15, 2
      %s28 = sadd.s32 1, %s23
      %p29 = scmp.ge.s32.totalorder %s28, 1
      %s30 = scalar_select %p29, 0, %s28
      %s31 = sadd.s32 1, %s22
      %s32 = scalar_select %p29, %s31, %s22
      %p33 = scmp.ge.s32.totalorder %s32, 4
      %s34 = scalar_select %p33, 0, %s32
      %s35 = ssub.s32 %s22, %s34
      %p36 = scmp.eq.s32.totalorder %s35, 0
      %s38 = sadd.s32 %s37, 1
      %s39 = scalar_select %p36, %s37, %s38
      %p42 = pneg %p36
      %p43 = scmp.eq.s32.totalorder %s15, 3
      %p44 = por %p42, %p43
      %p45 = scmp.ne.s32.totalorder %s37, %s40
      %p46 = scmp.eq.s32.totalorder %s15, 0
      %p47 = por %p45, %p46
      %p48 = scmp.ne.s32.totalorder %s37, %s40
      %p49 = scmp.eq.s32.totalorder %s20, 3
      %p50 = por %p48, %p49
      %p51 = scmp.ne.s32.totalorder %s40, %s41
      %p52 = scmp.eq.s32.totalorder %s20, 0
      %p53 = por %p51, %p52
      %p54 = scmp.ne.s32.totalorder %s40, %s41
      %p55 = scmp.eq.s32.totalorder %s21, 3
      %p56 = por %p54, %p55
      %p58 = scmp.ne.s32.totalorder %s41, %s57
      %p59 = scmp.eq.s32.totalorder %s21, 0
      %p60 = por %p58, %p59
      %s62 = sadd.s32 %s61, 1
      %p65 = scmp.eq.s32.totalorder %s15, 3
      %p66 = scmp.ne.s32.totalorder %s61, %s63
      %p67 = scmp.eq.s32.totalorder %s15, 0
      %p68 = por %p66, %p67
      %p69 = scmp.ne.s32.totalorder %s61, %s63
      %p70 = scmp.eq.s32.totalorder %s20, 3
      %p71 = por %p69, %p70
      %p72 = scmp.ne.s32.totalorder %s63, %s64
      %p73 = scmp.eq.s32.totalorder %s20, 0
      %p74 = por %p72, %p73
      %p75 = scmp.ne.s32.totalorder %s63, %s64
      %p76 = scmp.eq.s32.totalorder %s21, 3
      %p77 = por %p75, %p76
      %p79 = scmp.ne.s32.totalorder %s64, %s78
      %p80 = scmp.eq.s32.totalorder %s21, 0
      %p81 = por %p79, %p80
      %s83 = sadd.s32 %s82, 1
      %p86 = scmp.eq.s32.totalorder %s15, 3
      %p87 = scmp.ne.s32.totalorder %s82, %s84
      %p88 = scmp.eq.s32.totalorder %s15, 0
      %p89 = por %p87, %p88
      %p90 = scmp.ne.s32.totalorder %s82, %s84
      %p91 = scmp.eq.s32.totalorder %s20, 3
      %p92 = por %p90, %p91
      %p93 = scmp.ne.s32.totalorder %s84, %s85
      %p94 = scmp.eq.s32.totalorder %s20, 0
      %p95 = por %p93, %p94
      %p96 = scmp.ne.s32.totalorder %s84, %s85
      %p97 = scmp.eq.s32.totalorder %s21, 3
      %p98 = por %p96, %p97
      %p100 = scmp.ne.s32.totalorder %s85, %s99
      %p101 = scmp.eq.s32.totalorder %s21, 0
      %p102 = por %p100, %p101
      %s103 = ssub.s32 %s23, %s30
      %p104 = scmp.eq.s32.totalorder %s103, 0
      %s106 = sadd.s32 %s105, 1
      %s107 = scalar_select %p104, %s105, %s106
      %p110 = pneg %p104
      %p111 = scmp.eq.s32.totalorder %s15, 3
      %p112 = por %p110, %p111
      %p113 = scmp.ne.s32.totalorder %s105, %s108
      %p114 = scmp.eq.s32.totalorder %s15, 0
      %p115 = por %p113, %p114
      %p116 = scmp.ne.s32.totalorder %s105, %s108
      %p117 = scmp.eq.s32.totalorder %s20, 3
      %p118 = por %p116, %p117
      %p119 = scmp.ne.s32.totalorder %s108, %s109
      %p120 = scmp.eq.s32.totalorder %s20, 0
      %p121 = por %p119, %p120
      %p122 = scmp.ne.s32.totalorder %s108, %s109
      %p123 = scmp.eq.s32.totalorder %s21, 3
      %p124 = por %p122, %p123
      %p126 = scmp.ne.s32.totalorder %s109, %s125
      %p127 = scmp.eq.s32.totalorder %s21, 0
      %p128 = por %p126, %p127
      %s129 = ssub.s32 %s23, %s30
      %p130 = scmp.eq.s32.totalorder %s129, 0
      %s132 = sadd.s32 %s131, 1
      %s133 = scalar_select %p130, %s131, %s132
      %p136 = pneg %p130
      %p137 = scmp.eq.s32.totalorder %s15, 3
      %p138 = por %p136, %p137
      %p139 = scmp.ne.s32.totalorder %s131, %s134
      %p140 = scmp.eq.s32.totalorder %s15, 0
      %p141 = por %p139, %p140
      %p142 = scmp.ne.s32.totalorder %s131, %s134
      %p143 = scmp.eq.s32.totalorder %s20, 3
      %p144 = por %p142, %p143
      %p145 = scmp.ne.s32.totalorder %s134, %s135
      %p146 = scmp.eq.s32.totalorder %s20, 0
      %p147 = por %p145, %p146
      %p148 = scmp.ne.s32.totalorder %s134, %s135
      %p149 = scmp.eq.s32.totalorder %s21, 3
      %p150 = por %p148, %p149
      %p152 = scmp.ne.s32.totalorder %s135, %s151
      %p153 = scmp.eq.s32.totalorder %s21, 0
      %p154 = por %p152, %p153
      %s155 = ssub.s32 %s23, %s30
      %p156 = scmp.eq.s32.totalorder %s155, 0
      %s158 = sadd.s32 %s157, 1
      %s159 = scalar_select %p156, %s157, %s158
      %p162 = pneg %p156
      %p163 = scmp.eq.s32.totalorder %s15, 3
      %p164 = por %p162, %p163
      %p165 = scmp.ne.s32.totalorder %s157, %s160
      %p166 = scmp.eq.s32.totalorder %s15, 0
      %p167 = por %p165, %p166
      %p168 = scmp.ne.s32.totalorder %s157, %s160
      %p169 = scmp.eq.s32.totalorder %s20, 3
      %p170 = por %p168, %p169
      %p171 = scmp.ne.s32.totalorder %s160, %s161
      %p172 = scmp.eq.s32.totalorder %s20, 0
      %p173 = por %p171, %p172
      %p174 = scmp.ne.s32.totalorder %s160, %s161
      %p175 = scmp.eq.s32.totalorder %s21, 3
      %p176 = por %p174, %p175
      %p178 = scmp.ne.s32.totalorder %s161, %s177
      %p179 = scmp.eq.s32.totalorder %s21, 0
      %p180 = por %p178, %p179
      %s181 = ssub.s32 %s22, %s34
      %s182 = ssub.s32 %s23, %s30
      %s183 = sor.u32 %s181, %s182
      %p184 = scmp.eq.s32.totalorder %s183, 0
      %s186 = sadd.s32 %s185, 1
      %s187 = scalar_select %p184, %s185, %s186
      %p190 = pneg %p184
      %p191 = scmp.eq.s32.totalorder %s15, 3
      %p192 = por %p190, %p191
      %p193 = scmp.ne.s32.totalorder %s185, %s188
      %p194 = scmp.eq.s32.totalorder %s15, 0
      %p195 = por %p193, %p194
      %p196 = scmp.ne.s32.totalorder %s185, %s188
      %p197 = scmp.eq.s32.totalorder %s20, 3
      %p198 = por %p196, %p197
      %p199 = scmp.ne.s32.totalorder %s188, %s189
      %p200 = scmp.eq.s32.totalorder %s20, 0
      %p201 = por %p199, %p200
      %p202 = scmp.ne.s32.totalorder %s188, %s189
      %p203 = scmp.eq.s32.totalorder %s21, 3
      %p204 = por %p202, %p203
      %p206 = scmp.ne.s32.totalorder %s189, %s205
      %p207 = scmp.eq.s32.totalorder %s21, 0
      %p208 = por %p206, %p207
      %p209 = scmp.le.s32.totalorder 1, %s15
      %p210 = scmp.lt.s32.totalorder %s15, 5
      %p211 = pnand %p209, %p210
      %p212 = pneg %p211
      // Predicated region
      $region9: #{_fused_matmul.1} parent=5 // pred_check
        _
      $region10: #{_fused_matmul.1} parent=5 // pred_check_branch
        %214 = sbr.rel (%p211) target = $region12
      $region11: #{_fused_matmul.1} parent=5 // pred_region
        %s215 = ssub.s32 %s15, 1
        // Predicated region
        $region13: #{_fused_matmul.1} parent=11 // pred_check
          %p216 = pneg %p74
        $region14: #{_fused_matmul.1} parent=11 // pred_check_branch
          %218 = sbr.rel (%p216) target = $region16
        $region15: #{_fused_matmul.1} parent=11 // pred_region
          _
        $region16: #{_fused_matmul.1} parent=11 // pred_fallthru
          _
        // Predicated region
        $region17: #{_fused_matmul.1} parent=11 // pred_check
          %p219 = pneg %p95
        $region18: #{_fused_matmul.1} parent=11 // pred_check_branch
          %221 = sbr.rel (%p219) target = $region20
        $region19: #{_fused_matmul.1} parent=11 // pred_region
          _
        $region20: #{_fused_matmul.1} parent=11 // pred_fallthru
          _
        // Predicated region
        $region21: #{_fused_matmul.1} parent=11 // pred_check
          %p222 = pneg %p121
        $region22: #{_fused_matmul.1} parent=11 // pred_check_branch
          %224 = sbr.rel (%p222) target = $region24
        $region23: #{_fused_matmul.1} parent=11 // pred_region
          %p225 = scmp.lt.s32.totalorder %s25, 0
          %s226 = scalar_select %p225, %s25, 0
          %s227 = smul.addr %s226, 4
          %s228 = scalar_lea.vmem %s3, %s227
        $region24: #{_fused_matmul.1} parent=11 // pred_fallthru
          _
        // Predicated region
        $region25: #{_fused_matmul.1} parent=11 // pred_check
          %p229 = pneg %p147
        $region26: #{_fused_matmul.1} parent=11 // pred_check_branch
          %231 = sbr.rel (%p229) target = $region28
        $region27: #{_fused_matmul.1} parent=11 // pred_region
          %p232 = scmp.lt.s32.totalorder %s25, 0
          %s233 = scalar_select %p232, %s25, 0
          %s234 = scalar_lea.vmem %s4, %s233
        $region28: #{_fused_matmul.1} parent=11 // pred_fallthru
          _
        // Predicated region
        $region29: #{_fused_matmul.1} parent=11 // pred_check
          %p235 = pneg %p173
        $region30: #{_fused_matmul.1} parent=11 // pred_check_branch
          %237 = sbr.rel (%p235) target = $region32
        $region31: #{_fused_matmul.1} parent=11 // pred_region
          %p238 = scmp.lt.s32.totalorder %s25, 0
          %s239 = scalar_select %p238, %s25, 0
          %s240 = scalar_lea.vmem %s5, %s239
        $region32: #{_fused_matmul.1} parent=11 // pred_fallthru
          _
      $region12: #{_fused_matmul.1} parent=5 // pred_fallthru
        _
      %p241 = scmp.lt.s32.totalorder %s15, 4
      // Predicated region
      $region33: #{_fused_matmul.1} parent=5 // pred_check
        %p242 = pneg %p241
      $region34: #{_fused_matmul.1} parent=5 // pred_check_branch
        %244 = sbr.rel (%p242) target = $region36
      $region35: #{_fused_matmul.1} parent=5 // pred_region
        // Predicated region
        $region37: #{_fused_matmul.1} parent=35 // pred_check
          %p245 = pneg %p47
        $region38: #{_fused_matmul.1} parent=35 // pred_check_branch
          %247 = sbr.rel (%p245) target = $region40
        $region39: #{_fused_matmul.1} parent=35 // pred_region
          %s248 = sand.u32 %s37, 1
          %s249 = scalar_lea.sflag [#allocation3], %s248
          %s250 = sand.u32 %s37, 1
          %s251 = smul.addr %s250, 512
          %s252 = scalar_lea.vmem [#allocation2], %s251
          %s253 = smul.u32 64, %s22
          %255 = vsyncadd %s249, 0
          %s256 = smul.addr %s253, 2
          %s257 = smul.addr %s256, 4
          %s258 = scalar_lea.hbm %s0, %s257
          %s259 = sshll.u32 %s258, 4
          %s260 = int_to_ptr.hbm [resolvable:$true] %s259
          %s261 = sshll.u32 %s252, 4
          %s262 = int_to_ptr.vmem [resolvable:$true] %s261
          %267 = dma.hbm_to_vmem [thread:$0]  %s260, 8192, %s262, %s249, 128, 128, 8
        $region40: #{_fused_matmul.1} parent=35 // pred_fallthru
          _
      $region36: #{_fused_matmul.1} parent=5 // pred_fallthru
        _
      %p268 = scmp.le.s32.totalorder 1, %s15
      %p269 = scmp.lt.s32.totalorder %s15, 5
      %p270 = pnand %p268, %p269
      %p271 = pneg %p270
      // Predicated region
      $region41: #{_fused_matmul.1} parent=5 // pred_check
        _
      $region42: #{_fused_matmul.1} parent=5 // pred_check_branch
        %273 = sbr.rel (%p270) target = $region44
      $region43: #{_fused_matmul.1} parent=5 // pred_region
        %s274 = ssub.s32 %s15, 1
        %s275 = sand.u32 %s40, 1
        %s276 = scalar_lea.sflag [#allocation3], %s275
        %s277 = sand.u32 %s40, 1
        %s278 = smul.addr %s277, 512
        %s279 = scalar_lea.vmem [#allocation2], %s278
        // Predicated region
        $region45: #{_fused_matmul.1} parent=43 // pred_check
          %p280 = pneg %p53
        $region46: #{_fused_matmul.1} parent=43 // pred_check_branch
          %282 = sbr.rel (%p280) target = $region48
        $region47: #{_fused_matmul.1} parent=43 // pred_region
          %284 = dma.done %s276, 8192
        $region48: #{_fused_matmul.1} parent=43 // pred_fallthru
          _
        %s285 = sand.u32 %s40, 1
        %s286 = scalar_lea.sflag [#allocation3], %s285
        %s287 = sand.u32 %s40, 1
        %s288 = smul.addr %s287, 512
        %s289 = scalar_lea.vmem [#allocation2], %s288
        %p290 = pneg %p53
        %p291 = pneg %p50
        %p292 = pneg %p74
        %p293 = pneg %p71
        %p294 = pneg %p95
        %p295 = pneg %p92
        %p296 = scmp.lt.s32.totalorder %s25, 0
        %s297 = scalar_select %p296, %s25, 0
        %s298 = smul.addr %s297, 4
        %s299 = scalar_lea.vmem %s3, %s298
        %p300 = pneg %p121
        %p301 = pneg %p118
        %p302 = scmp.lt.s32.totalorder %s25, 0
        %s303 = scalar_select %p302, %s25, 0
        %s304 = scalar_lea.vmem %s4, %s303
        %p305 = pneg %p147
        %p306 = pneg %p144
        %p307 = scmp.lt.s32.totalorder %s25, 0
        %s308 = scalar_select %p307, %s25, 0
        %s309 = scalar_lea.vmem %s5, %s308
        %p310 = pneg %p173
        %p311 = pneg %p170
        %p312 = pneg %p201
        %p313 = pneg %p198
        %s314 = smul.u32 64, %s24
        %p315 = scmp.lt.s32.totalorder %s314, 255
        %s316 = scalar_select %p315, %s314, 255
        %p317 = scmp.lt.s32.totalorder %s25, 0
        %s318 = scalar_select %p317, %s25, 0
        %s319 = sadd.s32 %s318, %s316
        %s320 = smul.addr %s319, 4
        %s321 = scalar_lea.vmem %s6, %s320
        %s322 = smul.u32 64, %s24
        %p323 = scmp.lt.s32.totalorder %s25, 0
        %s324 = scalar_select %p323, %s25, 0
        %s325 = smul.addr %s324, 4
        %s326 = scalar_lea.vmem %s3, %s325
        %p327 = scmp.lt.s32.totalorder %s25, 0
        %s328 = scalar_select %p327, %s25, 0
        %s329 = scalar_lea.vmem %s4, %s328
        %p330 = scmp.lt.s32.totalorder %s25, 0
        %s331 = scalar_select %p330, %s25, 0
        %s332 = scalar_lea.vmem %s5, %s331
        %s333 = smul.u32 64, %s24
        %p334 = scmp.lt.s32.totalorder %s333, 255
        %s335 = scalar_select %p334, %s333, 255
        %p336 = scmp.lt.s32.totalorder %s25, 0
        %s337 = scalar_select %p336, %s25, 0
        %s338 = sadd.s32 %s337, %s335
        %s339 = smul.addr %s338, 4
        %s340 = scalar_lea.vmem %s6, %s339
        %s341 = smul.u32 64, %s24
        %v342 = vld [vmem:[%s279] sm:$0xff]
        %v343 = vld [vmem:[%s279 + $0x8] sm:$0xff]
        %v344 = vld [vmem:[%s279 + $0x10] sm:$0xff]
        %v345 = vld [vmem:[%s279 + $0x18] sm:$0xff]
        %v346 = vld [vmem:[%s279 + $0x20] sm:$0xff]
        %v347 = vld [vmem:[%s279 + $0x28] sm:$0xff]
        %v348 = vld [vmem:[%s279 + $0x30] sm:$0xff]
        %v349 = vld [vmem:[%s279 + $0x38] sm:$0xff]
        %v350 = vld [vmem:[%s279 + $0x40] sm:$0xff]
        %v351 = vld [vmem:[%s279 + $0x48] sm:$0xff]
        %v352 = vld [vmem:[%s279 + $0x50] sm:$0xff]
        %v353 = vld [vmem:[%s279 + $0x58] sm:$0xff]
        %v354 = vld [vmem:[%s279 + $0x60] sm:$0xff]
        %v355 = vld [vmem:[%s279 + $0x68] sm:$0xff]
        %v356 = vld [vmem:[%s279 + $0x70] sm:$0xff]
        %v357 = vld [vmem:[%s279 + $0x78] sm:$0xff]
        %v358 = vld [vmem:[%s279 + $0x80] sm:$0xff]
        %v359 = vld [vmem:[%s279 + $0x88] sm:$0xff]
        %v360 = vld [vmem:[%s279 + $0x90] sm:$0xff]
        %v361 = vld [vmem:[%s279 + $0x98] sm:$0xff]
        %v362 = vld [vmem:[%s279 + $0xa0] sm:$0xff]
        %v363 = vld [vmem:[%s279 + $0xa8] sm:$0xff]
        %v364 = vld [vmem:[%s279 + $0xb0] sm:$0xff]
        %v365 = vld [vmem:[%s279 + $0xb8] sm:$0xff]
        %v366 = vld [vmem:[%s279 + $0xc0] sm:$0xff]
        %v367 = vld [vmem:[%s279 + $0xc8] sm:$0xff]
        %v368 = vld [vmem:[%s279 + $0xd0] sm:$0xff]
        %v369 = vld [vmem:[%s279 + $0xd8] sm:$0xff]
        %v370 = vld [vmem:[%s279 + $0xe0] sm:$0xff]
        %v371 = vld [vmem:[%s279 + $0xe8] sm:$0xff]
        %v372 = vld [vmem:[%s279 + $0xf0] sm:$0xff]
        %v373 = vld [vmem:[%s279 + $0xf8] sm:$0xff]
        %v374 = vld [vmem:[%s279 + $0x100] sm:$0xff]
        %v375 = vld [vmem:[%s279 + $0x108] sm:$0xff]
        %v376 = vld [vmem:[%s279 + $0x110] sm:$0xff]
        %v377 = vld [vmem:[%s279 + $0x118] sm:$0xff]
        %v378 = vld [vmem:[%s279 + $0x120] sm:$0xff]
        %v379 = vld [vmem:[%s279 + $0x128] sm:$0xff]
        %v380 = vld [vmem:[%s279 + $0x130] sm:$0xff]
        %v381 = vld [vmem:[%s279 + $0x138] sm:$0xff]
        %v382 = vld [vmem:[%s279 + $0x140] sm:$0xff]
        %v383 = vld [vmem:[%s279 + $0x148] sm:$0xff]
        %v384 = vld [vmem:[%s279 + $0x150] sm:$0xff]
        %v385 = vld [vmem:[%s279 + $0x158] sm:$0xff]
        %v386 = vld [vmem:[%s279 + $0x160] sm:$0xff]
        %v387 = vld [vmem:[%s279 + $0x168] sm:$0xff]
        %v388 = vld [vmem:[%s279 + $0x170] sm:$0xff]
        %v389 = vld [vmem:[%s279 + $0x178] sm:$0xff]
        %v390 = vld [vmem:[%s279 + $0x180] sm:$0xff]
        %v391 = vld [vmem:[%s279 + $0x188] sm:$0xff]
        %v392 = vld [vmem:[%s279 + $0x190] sm:$0xff]
        %v393 = vld [vmem:[%s279 + $0x198] sm:$0xff]
        %v394 = vld [vmem:[%s279 + $0x1a0] sm:$0xff]
        %v395 = vld [vmem:[%s279 + $0x1a8] sm:$0xff]
        %v396 = vld [vmem:[%s279 + $0x1b0] sm:$0xff]
        %v397 = vld [vmem:[%s279 + $0x1b8] sm:$0xff]
        %v398 = vld [vmem:[%s279 + $0x1c0] sm:$0xff]
        %v399 = vld [vmem:[%s279 + $0x1c8] sm:$0xff]
        %v400 = vld [vmem:[%s279 + $0x1d0] sm:$0xff]
        %v401 = vld [vmem:[%s279 + $0x1d8] sm:$0xff]
        %v402 = vld [vmem:[%s279 + $0x1e0] sm:$0xff]
        %v403 = vld [vmem:[%s279 + $0x1e8] sm:$0xff]
        %v404 = vld [vmem:[%s279 + $0x1f0] sm:$0xff]
        %v405 = vld [vmem:[%s279 + $0x1f8] sm:$0xff]
        %v406 = vld [vmem:[%s326] sm:$0xf]
        %v407 = vld [vmem:[%s326 + $0x4] sm:$0xf]
        %v408 = vld [vmem:[%s326 + $0x8] sm:$0xf]
        %v409 = vld [vmem:[%s326 + $0xc] sm:$0xf]
        %v410 = vld [vmem:[%s326 + $0x10] sm:$0xf]
        %v411 = vld [vmem:[%s326 + $0x14] sm:$0xf]
        %v412 = vld [vmem:[%s326 + $0x18] sm:$0xf]
        %v413 = vld [vmem:[%s326 + $0x1c] sm:$0xf]
        %v414 = vld [vmem:[%s326 + $0x20] sm:$0xf]
        %v415 = vld [vmem:[%s326 + $0x24] sm:$0xf]
        %v416 = vld [vmem:[%s326 + $0x28] sm:$0xf]
        %v417 = vld [vmem:[%s326 + $0x2c] sm:$0xf]
        %v418 = vld [vmem:[%s326 + $0x30] sm:$0xf]
        %v419 = vld [vmem:[%s326 + $0x34] sm:$0xf]
        %v420 = vld [vmem:[%s326 + $0x38] sm:$0xf]
        %v421 = vld [vmem:[%s326 + $0x3c] sm:$0xf]
        %v422 = vld [vmem:[%s326 + $0x40] sm:$0xf]
        %v423 = vld [vmem:[%s326 + $0x44] sm:$0xf]
        %v424 = vld [vmem:[%s326 + $0x48] sm:$0xf]
        %v425 = vld [vmem:[%s326 + $0x4c] sm:$0xf]
        %v426 = vld [vmem:[%s326 + $0x50] sm:$0xf]
        %v427 = vld [vmem:[%s326 + $0x54] sm:$0xf]
        %v428 = vld [vmem:[%s326 + $0x58] sm:$0xf]
        %v429 = vld [vmem:[%s326 + $0x5c] sm:$0xf]
        %v430 = vld [vmem:[%s326 + $0x60] sm:$0xf]
        %v431 = vld [vmem:[%s326 + $0x64] sm:$0xf]
        %v432 = vld [vmem:[%s326 + $0x68] sm:$0xf]
        %v433 = vld [vmem:[%s326 + $0x6c] sm:$0xf]
        %v434 = vld [vmem:[%s326 + $0x70] sm:$0xf]
        %v435 = vld [vmem:[%s326 + $0x74] sm:$0xf]
        %v436 = vld [vmem:[%s326 + $0x78] sm:$0xf]
        %v437 = vld [vmem:[%s326 + $0x7c] sm:$0xf]
        %v502 = vunpack.c.l.b16 %v342
        %v503 = vunpack.c.h.b16 %v342
        %v504 = vunpack.c.l.b16 %v343
        %v505 = vunpack.c.h.b16 %v343
        %v506 = vunpack.c.l.b16 %v344
        %v507 = vunpack.c.h.b16 %v344
        %v508 = vunpack.c.l.b16 %v345
        %v509 = vunpack.c.h.b16 %v345
        %v510 = vunpack.c.l.b16 %v346
        %v511 = vunpack.c.h.b16 %v346
        %v512 = vunpack.c.l.b16 %v347
        %v513 = vunpack.c.h.b16 %v347
        %v514 = vunpack.c.l.b16 %v348
        %v515 = vunpack.c.h.b16 %v348
        %v516 = vunpack.c.l.b16 %v349
        %v517 = vunpack.c.h.b16 %v349
        %v518 = vunpack.c.l.b16 %v350
        %v519 = vunpack.c.h.b16 %v350
        %v520 = vunpack.c.l.b16 %v351
        %v521 = vunpack.c.h.b16 %v351
        %v522 = vunpack.c.l.b16 %v352
        %v523 = vunpack.c.h.b16 %v352
        %v524 = vunpack.c.l.b16 %v353
        %v525 = vunpack.c.h.b16 %v353
        %v526 = vunpack.c.l.b16 %v354
        %v527 = vunpack.c.h.b16 %v354
        %v528 = vunpack.c.l.b16 %v355
        %v529 = vunpack.c.h.b16 %v355
        %v530 = vunpack.c.l.b16 %v356
        %v531 = vunpack.c.h.b16 %v356
        %v532 = vunpack.c.l.b16 %v357
        %v533 = vunpack.c.h.b16 %v357
        %v534 = vunpack.c.l.b16 %v358
        %v535 = vunpack.c.h.b16 %v358
        %v536 = vunpack.c.l.b16 %v359
        %v537 = vunpack.c.h.b16 %v359
        %v538 = vunpack.c.l.b16 %v360
        %v539 = vunpack.c.h.b16 %v360
        %v540 = vunpack.c.l.b16 %v361
        %v541 = vunpack.c.h.b16 %v361
        %v542 = vunpack.c.l.b16 %v362
        %v543 = vunpack.c.h.b16 %v362
        %v544 = vunpack.c.l.b16 %v363
        %v545 = vunpack.c.h.b16 %v363
        %v546 = vunpack.c.l.b16 %v364
        %v547 = vunpack.c.h.b16 %v364
        %v548 = vunpack.c.l.b16 %v365
        %v549 = vunpack.c.h.b16 %v365
        %v550 = vunpack.c.l.b16 %v366
        %v551 = vunpack.c.h.b16 %v366
        %v552 = vunpack.c.l.b16 %v367
        %v553 = vunpack.c.h.b16 %v367
        %v554 = vunpack.c.l.b16 %v368
        %v555 = vunpack.c.h.b16 %v368
        %v556 = vunpack.c.l.b16 %v369
        %v557 = vunpack.c.h.b16 %v369
        %v558 = vunpack.c.l.b16 %v370
        %v559 = vunpack.c.h.b16 %v370
        %v560 = vunpack.c.l.b16 %v371
        %v561 = vunpack.c.h.b16 %v371
        %v562 = vunpack.c.l.b16 %v372
        %v563 = vunpack.c.h.b16 %v372
        %v564 = vunpack.c.l.b16 %v373
        %v565 = vunpack.c.h.b16 %v373
        %v566 = vunpack.c.l.b16 %v374
        %v567 = vunpack.c.h.b16 %v374
        %v568 = vunpack.c.l.b16 %v375
        %v569 = vunpack.c.h.b16 %v375
        %v570 = vunpack.c.l.b16 %v376
        %v571 = vunpack.c.h.b16 %v376
        %v572 = vunpack.c.l.b16 %v377
        %v573 = vunpack.c.h.b16 %v377
        %v574 = vunpack.c.l.b16 %v378
        %v575 = vunpack.c.h.b16 %v378
        %v576 = vunpack.c.l.b16 %v379
        %v577 = vunpack.c.h.b16 %v379
        %v578 = vunpack.c.l.b16 %v380
        %v579 = vunpack.c.h.b16 %v380
        %v580 = vunpack.c.l.b16 %v381
        %v581 = vunpack.c.h.b16 %v381
        %v582 = vunpack.c.l.b16 %v382
        %v583 = vunpack.c.h.b16 %v382
        %v584 = vunpack.c.l.b16 %v383
        %v585 = vunpack.c.h.b16 %v383
        %v586 = vunpack.c.l.b16 %v384
        %v587 = vunpack.c.h.b16 %v384
        %v588 = vunpack.c.l.b16 %v385
        %v589 = vunpack.c.h.b16 %v385
        %v590 = vunpack.c.l.b16 %v386
        %v591 = vunpack.c.h.b16 %v386
        %v592 = vunpack.c.l.b16 %v387
        %v593 = vunpack.c.h.b16 %v387
        %v594 = vunpack.c.l.b16 %v388
        %v595 = vunpack.c.h.b16 %v388
        %v596 = vunpack.c.l.b16 %v389
        %v597 = vunpack.c.h.b16 %v389
        %v598 = vunpack.c.l.b16 %v390
        %v599 = vunpack.c.h.b16 %v390
        %v600 = vunpack.c.l.b16 %v391
        %v601 = vunpack.c.h.b16 %v391
        %v602 = vunpack.c.l.b16 %v392
        %v603 = vunpack.c.h.b16 %v392
        %v604 = vunpack.c.l.b16 %v393
        %v605 = vunpack.c.h.b16 %v393
        %v606 = vunpack.c.l.b16 %v394
        %v607 = vunpack.c.h.b16 %v394
        %v608 = vunpack.c.l.b16 %v395
        %v609 = vunpack.c.h.b16 %v395
        %v610 = vunpack.c.l.b16 %v396
        %v611 = vunpack.c.h.b16 %v396
        %v612 = vunpack.c.l.b16 %v397
        %v613 = vunpack.c.h.b16 %v397
        %v614 = vunpack.c.l.b16 %v398
        %v615 = vunpack.c.h.b16 %v398
        %v616 = vunpack.c.l.b16 %v399
        %v617 = vunpack.c.h.b16 %v399
        %v618 = vunpack.c.l.b16 %v400
        %v619 = vunpack.c.h.b16 %v400
        %v620 = vunpack.c.l.b16 %v401
        %v621 = vunpack.c.h.b16 %v401
        %v622 = vunpack.c.l.b16 %v402
        %v623 = vunpack.c.h.b16 %v402
        %v624 = vunpack.c.l.b16 %v403
        %v625 = vunpack.c.h.b16 %v403
        %v626 = vunpack.c.l.b16 %v404
        %v627 = vunpack.c.h.b16 %v404
        %v628 = vunpack.c.l.b16 %v405
        %v629 = vunpack.c.h.b16 %v405
        %v630 = vpack.c.b16 %v504, %v502
        %v631 = vpack.c.b16 %v505, %v503
        %v632 = vpack.c.b16 %v508, %v506
        %v633 = vpack.c.b16 %v509, %v507
        %v634 = vpack.c.b16 %v512, %v510
        %v635 = vpack.c.b16 %v513, %v511
        %v636 = vpack.c.b16 %v516, %v514
        %v637 = vpack.c.b16 %v517, %v515
        %v638 = vpack.c.b16 %v520, %v518
        %v639 = vpack.c.b16 %v521, %v519
        %v640 = vpack.c.b16 %v524, %v522
        %v641 = vpack.c.b16 %v525, %v523
        %v642 = vpack.c.b16 %v528, %v526
        %v643 = vpack.c.b16 %v529, %v527
        %v644 = vpack.c.b16 %v532, %v530
        %v645 = vpack.c.b16 %v533, %v531
        %v646 = vpack.c.b16 %v536, %v534
        %v647 = vpack.c.b16 %v537, %v535
        %v648 = vpack.c.b16 %v540, %v538
        %v649 = vpack.c.b16 %v541, %v539
        %v650 = vpack.c.b16 %v544, %v542
        %v651 = vpack.c.b16 %v545, %v543
        %v652 = vpack.c.b16 %v548, %v546
        %v653 = vpack.c.b16 %v549, %v547
        %v654 = vpack.c.b16 %v552, %v550
        %v655 = vpack.c.b16 %v553, %v551
        %v656 = vpack.c.b16 %v556, %v554
        %v657 = vpack.c.b16 %v557, %v555
        %v658 = vpack.c.b16 %v560, %v558
        %v659 = vpack.c.b16 %v561, %v559
        %v660 = vpack.c.b16 %v564, %v562
        %v661 = vpack.c.b16 %v565, %v563
        %v662 = vpack.c.b16 %v568, %v566
        %v663 = vpack.c.b16 %v569, %v567
        %v664 = vpack.c.b16 %v572, %v570
        %v665 = vpack.c.b16 %v573, %v571
        %v666 = vpack.c.b16 %v576, %v574
        %v667 = vpack.c.b16 %v577, %v575
        %v668 = vpack.c.b16 %v580, %v578
        %v669 = vpack.c.b16 %v581, %v579
        %v670 = vpack.c.b16 %v584, %v582
        %v671 = vpack.c.b16 %v585, %v583
        %v672 = vpack.c.b16 %v588, %v586
        %v673 = vpack.c.b16 %v589, %v587
        %v674 = vpack.c.b16 %v592, %v590
        %v675 = vpack.c.b16 %v593, %v591
        %v676 = vpack.c.b16 %v596, %v594
        %v677 = vpack.c.b16 %v597, %v595
        %v678 = vpack.c.b16 %v600, %v598
        %v679 = vpack.c.b16 %v601, %v599
        %v680 = vpack.c.b16 %v604, %v602
        %v681 = vpack.c.b16 %v605, %v603
        %v682 = vpack.c.b16 %v608, %v606
        %v683 = vpack.c.b16 %v609, %v607
        %v684 = vpack.c.b16 %v612, %v610
        %v685 = vpack.c.b16 %v613, %v611
        %v686 = vpack.c.b16 %v616, %v614
        %v687 = vpack.c.b16 %v617, %v615
        %v688 = vpack.c.b16 %v620, %v618
        %v689 = vpack.c.b16 %v621, %v619
        %v690 = vpack.c.b16 %v624, %v622
        %v691 = vpack.c.b16 %v625, %v623
        %v692 = vpack.c.b16 %v628, %v626
        %v693 = vpack.c.b16 %v629, %v627
        %v790 = vunpack.c.l.b16 %v406
        %v791 = vunpack.c.l.b16 %v407
        %v792 = vunpack.c.l.b16 %v408
        %v793 = vunpack.c.l.b16 %v409
        %v794 = vunpack.c.l.b16 %v410
        %v795 = vunpack.c.l.b16 %v411
        %v796 = vunpack.c.l.b16 %v412
        %v797 = vunpack.c.l.b16 %v413
        %v798 = vunpack.c.l.b16 %v414
        %v799 = vunpack.c.l.b16 %v415
        %v800 = vunpack.c.l.b16 %v416
        %v801 = vunpack.c.l.b16 %v417
        %v802 = vunpack.c.l.b16 %v418
        %v803 = vunpack.c.l.b16 %v419
        %v804 = vunpack.c.l.b16 %v420
        %v805 = vunpack.c.l.b16 %v421
        %v806 = vunpack.c.l.b16 %v422
        %v807 = vunpack.c.l.b16 %v423
        %v808 = vunpack.c.l.b16 %v424
        %v809 = vunpack.c.l.b16 %v425
        %v810 = vunpack.c.l.b16 %v426
        %v811 = vunpack.c.l.b16 %v427
        %v812 = vunpack.c.l.b16 %v428
        %v813 = vunpack.c.l.b16 %v429
        %v814 = vunpack.c.l.b16 %v430
        %v815 = vunpack.c.l.b16 %v431
        %v816 = vunpack.c.l.b16 %v432
        %v817 = vunpack.c.l.b16 %v433
        %v818 = vunpack.c.l.b16 %v434
        %v819 = vunpack.c.l.b16 %v435
        %v820 = vunpack.c.l.b16 %v436
        %v821 = vunpack.c.l.b16 %v437
        %v822 = vpack.c.b16 %v791, %v790
        %v823 = vpack.c.b16 %v793, %v792
        %v824 = vpack.c.b16 %v795, %v794
        %v825 = vpack.c.b16 %v797, %v796
        %v826 = vpack.c.b16 %v799, %v798
        %v827 = vpack.c.b16 %v801, %v800
        %v828 = vpack.c.b16 %v803, %v802
        %v829 = vpack.c.b16 %v805, %v804
        %v830 = vpack.c.b16 %v807, %v806
        %v831 = vpack.c.b16 %v809, %v808
        %v832 = vpack.c.b16 %v811, %v810
        %v833 = vpack.c.b16 %v813, %v812
        %v834 = vpack.c.b16 %v815, %v814
        %v835 = vpack.c.b16 %v817, %v816
        %v836 = vpack.c.b16 %v819, %v818
        %v837 = vpack.c.b16 %v821, %v820
        %854 = vmatpush.bf16.msra.mxu0 %v829
        %855 = vmatpush.bf16.msra.mxu0 %v828
        %856 = vmatpush.bf16.msra.mxu0 %v827
        %857 = vmatpush.bf16.msra.mxu0 %v826
        %858 = vmatpush.bf16.msra.mxu0 %v825
        %859 = vmatpush.bf16.msra.mxu0 %v824
        %860 = vmatpush.bf16.msra.mxu0 %v823
        %861 = vmatpush.bf16.msra.mxu0 %v822
        %862 = vmatmul.bf16.gmra.mxu0 %v630
        %v863 = vpop.f32.mrf.mxu0
        %v864 = vadd.f32 0.0, %v863
        %v865 = vpop.f32.mrf.mxu0
        %v866 = vadd.f32 0.0, %v865
        %867 = vmatmul.bf16.gmra.mxu0 %v632
        %v868 = vpop.f32.mrf.mxu0
        %v869 = vadd.f32 0.0, %v868
        %v870 = vpop.f32.mrf.mxu0
        %v871 = vadd.f32 0.0, %v870
        %872 = vmatmul.bf16.gmra.mxu0 %v634
        %v873 = vpop.f32.mrf.mxu0
        %v874 = vadd.f32 0.0, %v873
        %v875 = vpop.f32.mrf.mxu0
        %v876 = vadd.f32 0.0, %v875
        %877 = vmatmul.bf16.gmra.mxu0 %v636
        %v878 = vpop.f32.mrf.mxu0
        %v879 = vadd.f32 0.0, %v878
        %v880 = vpop.f32.mrf.mxu0
        %v881 = vadd.f32 0.0, %v880
        %882 = vmatmul.bf16.gmra.mxu0 %v638
        %v883 = vpop.f32.mrf.mxu0
        %v884 = vadd.f32 0.0, %v883
        %v885 = vpop.f32.mrf.mxu0
        %v886 = vadd.f32 0.0, %v885
        %887 = vmatmul.bf16.gmra.mxu0 %v640
        %v888 = vpop.f32.mrf.mxu0
        %v889 = vadd.f32 0.0, %v888
        %v890 = vpop.f32.mrf.mxu0
        %v891 = vadd.f32 0.0, %v890
        %892 = vmatmul.bf16.gmra.mxu0 %v642
        %v893 = vpop.f32.mrf.mxu0
        %v894 = vadd.f32 0.0, %v893
        %v895 = vpop.f32.mrf.mxu0
        %v896 = vadd.f32 0.0, %v895
        %897 = vmatmul.bf16.gmra.mxu0 %v644
        %v898 = vpop.f32.mrf.mxu0
        %v899 = vadd.f32 0.0, %v898
        %v900 = vpop.f32.mrf.mxu0
        %v901 = vadd.f32 0.0, %v900
        %902 = vmatmul.bf16.gmra.mxu0 %v646
        %v903 = vpop.f32.mrf.mxu0
        %v904 = vadd.f32 0.0, %v903
        %v905 = vpop.f32.mrf.mxu0
        %v906 = vadd.f32 0.0, %v905
        %907 = vmatmul.bf16.gmra.mxu0 %v648
        %v908 = vpop.f32.mrf.mxu0
        %v909 = vadd.f32 0.0, %v908
        %v910 = vpop.f32.mrf.mxu0
        %v911 = vadd.f32 0.0, %v910
        %912 = vmatmul.bf16.gmra.mxu0 %v650
        %v913 = vpop.f32.mrf.mxu0
        %v914 = vadd.f32 0.0, %v913
        %v915 = vpop.f32.mrf.mxu0
        %v916 = vadd.f32 0.0, %v915
        %917 = vmatmul.bf16.gmra.mxu0 %v652
        %v918 = vpop.f32.mrf.mxu0
        %v919 = vadd.f32 0.0, %v918
        %v920 = vpop.f32.mrf.mxu0
        %v921 = vadd.f32 0.0, %v920
        %922 = vmatmul.bf16.gmra.mxu0 %v654
        %v923 = vpop.f32.mrf.mxu0
        %v924 = vadd.f32 0.0, %v923
        %v925 = vpop.f32.mrf.mxu0
        %v926 = vadd.f32 0.0, %v925
        %927 = vmatmul.bf16.gmra.mxu0 %v656
        %v928 = vpop.f32.mrf.mxu0
        %v929 = vadd.f32 0.0, %v928
        %v930 = vpop.f32.mrf.mxu0
        %v931 = vadd.f32 0.0, %v930
        %932 = vmatmul.bf16.gmra.mxu0 %v658
        %v933 = vpop.f32.mrf.mxu0
        %v934 = vadd.f32 0.0, %v933
        %v935 = vpop.f32.mrf.mxu0
        %v936 = vadd.f32 0.0, %v935
        %937 = vmatmul.bf16.gmra.mxu0 %v660
        %v938 = vpop.f32.mrf.mxu0
        %v939 = vadd.f32 0.0, %v938
        %v940 = vpop.f32.mrf.mxu0
        %v941 = vadd.f32 0.0, %v940
        %942 = vmatmul.bf16.gmra.mxu0 %v662
        %v943 = vpop.f32.mrf.mxu0
        %v944 = vadd.f32 0.0, %v943
        %v945 = vpop.f32.mrf.mxu0
        %v946 = vadd.f32 0.0, %v945
        %947 = vmatmul.bf16.gmra.mxu0 %v664
        %v948 = vpop.f32.mrf.mxu0
        %v949 = vadd.f32 0.0, %v948
        %v950 = vpop.f32.mrf.mxu0
        %v951 = vadd.f32 0.0, %v950
        %952 = vmatmul.bf16.gmra.mxu0 %v666
        %v953 = vpop.f32.mrf.mxu0
        %v954 = vadd.f32 0.0, %v953
        %v955 = vpop.f32.mrf.mxu0
        %v956 = vadd.f32 0.0, %v955
        %957 = vmatmul.bf16.gmra.mxu0 %v668
        %v958 = vpop.f32.mrf.mxu0
        %v959 = vadd.f32 0.0, %v958
        %v960 = vpop.f32.mrf.mxu0
        %v961 = vadd.f32 0.0, %v960
        %962 = vmatmul.bf16.gmra.mxu0 %v670
        %v963 = vpop.f32.mrf.mxu0
        %v964 = vadd.f32 0.0, %v963
        %v965 = vpop.f32.mrf.mxu0
        %v966 = vadd.f32 0.0, %v965
        %967 = vmatmul.bf16.gmra.mxu0 %v672
        %v968 = vpop.f32.mrf.mxu0
        %v969 = vadd.f32 0.0, %v968
        %v970 = vpop.f32.mrf.mxu0
        %v971 = vadd.f32 0.0, %v970
        %972 = vmatmul.bf16.gmra.mxu0 %v674
        %v973 = vpop.f32.mrf.mxu0
        %v974 = vadd.f32 0.0, %v973
        %v975 = vpop.f32.mrf.mxu0
        %v976 = vadd.f32 0.0, %v975
        %977 = vmatmul.bf16.gmra.mxu0 %v676
        %v978 = vpop.f32.mrf.mxu0
        %v979 = vadd.f32 0.0, %v978
        %v980 = vpop.f32.mrf.mxu0
        %v981 = vadd.f32 0.0, %v980
        %982 = vmatmul.bf16.gmra.mxu0 %v678
        %v983 = vpop.f32.mrf.mxu0
        %v984 = vadd.f32 0.0, %v983
        %v985 = vpop.f32.mrf.mxu0
        %v986 = vadd.f32 0.0, %v985
        %987 = vmatmul.bf16.gmra.mxu0 %v680
        %v988 = vpop.f32.mrf.mxu0
        %v989 = vadd.f32 0.0, %v988
        %v990 = vpop.f32.mrf.mxu0
        %v991 = vadd.f32 0.0, %v990
        %992 = vmatmul.bf16.gmra.mxu0 %v682
        %v993 = vpop.f32.mrf.mxu0
        %v994 = vadd.f32 0.0, %v993
        %v995 = vpop.f32.mrf.mxu0
        %v996 = vadd.f32 0.0, %v995
        %997 = vmatmul.bf16.gmra.mxu0 %v684
        %v998 = vpop.f32.mrf.mxu0
        %v999 = vadd.f32 0.0, %v998
        %v1000 = vpop.f32.mrf.mxu0
        %v1001 = vadd.f32 0.0, %v1000
        %1002 = vmatmul.bf16.gmra.mxu0 %v686
        %v1003 = vpop.f32.mrf.mxu0
        %v1004 = vadd.f32 0.0, %v1003
        %v1005 = vpop.f32.mrf.mxu0
        %v1006 = vadd.f32 0.0, %v1005
        %1007 = vmatmul.bf16.gmra.mxu0 %v688
        %v1008 = vpop.f32.mrf.mxu0
        %v1009 = vadd.f32 0.0, %v1008
        %v1010 = vpop.f32.mrf.mxu0
        %v1011 = vadd.f32 0.0, %v1010
        %1012 = vmatmul.bf16.gmra.mxu0 %v690
        %v1013 = vpop.f32.mrf.mxu0
        %v1014 = vadd.f32 0.0, %v1013
        %v1015 = vpop.f32.mrf.mxu0
        %v1016 = vadd.f32 0.0, %v1015
        %1017 = vmatmul.bf16.gmra.mxu0 %v692
        %v1018 = vpop.f32.mrf.mxu0
        %v1019 = vadd.f32 0.0, %v1018
        %v1020 = vpop.f32.mrf.mxu0
        %v1021 = vadd.f32 0.0, %v1020
        %1022 = vdwg.mxu0
        %1023 = vmatpush.bf16.msra.mxu0 %v837
        %1024 = vmatpush.bf16.msra.mxu0 %v836
        %1025 = vmatpush.bf16.msra.mxu0 %v835
        %1026 = vmatpush.bf16.msra.mxu0 %v834
        %1027 = vmatpush.bf16.msra.mxu0 %v833
        %1028 = vmatpush.bf16.msra.mxu0 %v832
        %1029 = vmatpush.bf16.msra.mxu0 %v831
        %1030 = vmatpush.bf16.msra.mxu0 %v830
        %1031 = vmatmul.bf16.gmra.mxu0 %v631
        %v1032 = vpop.f32.mrf.mxu0
        %v1033 = vadd.f32 %v864, %v1032
        %v1034 = vpop.f32.mrf.mxu0
        %v1035 = vadd.f32 %v866, %v1034
        %1036 = vmatmul.bf16.gmra.mxu0 %v633
        %v1037 = vpop.f32.mrf.mxu0
        %v1038 = vadd.f32 %v869, %v1037
        %v1039 = vpop.f32.mrf.mxu0
        %v1040 = vadd.f32 %v871, %v1039
        %1041 = vmatmul.bf16.gmra.mxu0 %v635
        %v1042 = vpop.f32.mrf.mxu0
        %v1043 = vadd.f32 %v874, %v1042
        %v1044 = vpop.f32.mrf.mxu0
        %v1045 = vadd.f32 %v876, %v1044
        %1046 = vmatmul.bf16.gmra.mxu0 %v637
        %v1047 = vpop.f32.mrf.mxu0
        %v1048 = vadd.f32 %v879, %v1047
        %v1049 = vpop.f32.mrf.mxu0
        %v1050 = vadd.f32 %v881, %v1049
        %1051 = vmatmul.bf16.gmra.mxu0 %v639
        %v1052 = vpop.f32.mrf.mxu0
        %v1053 = vadd.f32 %v884, %v1052
        %v1054 = vpop.f32.mrf.mxu0
        %v1055 = vadd.f32 %v886, %v1054
        %1056 = vmatmul.bf16.gmra.mxu0 %v641
        %v1057 = vpop.f32.mrf.mxu0
        %v1058 = vadd.f32 %v889, %v1057
        %v1059 = vpop.f32.mrf.mxu0
        %v1060 = vadd.f32 %v891, %v1059
        %1061 = vmatmul.bf16.gmra.mxu0 %v643
        %v1062 = vpop.f32.mrf.mxu0
        %v1063 = vadd.f32 %v894, %v1062
        %v1064 = vpop.f32.mrf.mxu0
        %v1065 = vadd.f32 %v896, %v1064
        %1066 = vmatmul.bf16.gmra.mxu0 %v645
        %v1067 = vpop.f32.mrf.mxu0
        %v1068 = vadd.f32 %v899, %v1067
        %v1069 = vpop.f32.mrf.mxu0
        %v1070 = vadd.f32 %v901, %v1069
        %1071 = vmatmul.bf16.gmra.mxu0 %v647
        %v1072 = vpop.f32.mrf.mxu0
        %v1073 = vadd.f32 %v904, %v1072
        %v1074 = vpop.f32.mrf.mxu0
        %v1075 = vadd.f32 %v906, %v1074
        %1076 = vmatmul.bf16.gmra.mxu0 %v649
        %v1077 = vpop.f32.mrf.mxu0
        %v1078 = vadd.f32 %v909, %v1077
        %v1079 = vpop.f32.mrf.mxu0
        %v1080 = vadd.f32 %v911, %v1079
        %1081 = vmatmul.bf16.gmra.mxu0 %v651
        %v1082 = vpop.f32.mrf.mxu0
        %v1083 = vadd.f32 %v914, %v1082
        %v1084 = vpop.f32.mrf.mxu0
        %v1085 = vadd.f32 %v916, %v1084
        %1086 = vmatmul.bf16.gmra.mxu0 %v653
        %v1087 = vpop.f32.mrf.mxu0
        %v1088 = vadd.f32 %v919, %v1087
        %v1089 = vpop.f32.mrf.mxu0
        %v1090 = vadd.f32 %v921, %v1089
        %1091 = vmatmul.bf16.gmra.mxu0 %v655
        %v1092 = vpop.f32.mrf.mxu0
        %v1093 = vadd.f32 %v924, %v1092
        %v1094 = vpop.f32.mrf.mxu0
        %v1095 = vadd.f32 %v926, %v1094
        %1096 = vmatmul.bf16.gmra.mxu0 %v657
        %v1097 = vpop.f32.mrf.mxu0
        %v1098 = vadd.f32 %v929, %v1097
        %v1099 = vpop.f32.mrf.mxu0
        %v1100 = vadd.f32 %v931, %v1099
        %1101 = vmatmul.bf16.gmra.mxu0 %v659
        %v1102 = vpop.f32.mrf.mxu0
        %v1103 = vadd.f32 %v934, %v1102
        %v1104 = vpop.f32.mrf.mxu0
        %v1105 = vadd.f32 %v936, %v1104
        %1106 = vmatmul.bf16.gmra.mxu0 %v661
        %v1107 = vpop.f32.mrf.mxu0
        %v1108 = vadd.f32 %v939, %v1107
        %v1109 = vpop.f32.mrf.mxu0
        %v1110 = vadd.f32 %v941, %v1109
        %1111 = vmatmul.bf16.gmra.mxu0 %v663
        %v1112 = vpop.f32.mrf.mxu0
        %v1113 = vadd.f32 %v944, %v1112
        %v1114 = vpop.f32.mrf.mxu0
        %v1115 = vadd.f32 %v946, %v1114
        %1116 = vmatmul.bf16.gmra.mxu0 %v665
        %v1117 = vpop.f32.mrf.mxu0
        %v1118 = vadd.f32 %v949, %v1117
        %v1119 = vpop.f32.mrf.mxu0
        %v1120 = vadd.f32 %v951, %v1119
        %1121 = vmatmul.bf16.gmra.mxu0 %v667
        %v1122 = vpop.f32.mrf.mxu0
        %v1123 = vadd.f32 %v954, %v1122
        %v1124 = vpop.f32.mrf.mxu0
        %v1125 = vadd.f32 %v956, %v1124
        %1126 = vmatmul.bf16.gmra.mxu0 %v669
        %v1127 = vpop.f32.mrf.mxu0
        %v1128 = vadd.f32 %v959, %v1127
        %v1129 = vpop.f32.mrf.mxu0
        %v1130 = vadd.f32 %v961, %v1129
        %1131 = vmatmul.bf16.gmra.mxu0 %v671
        %v1132 = vpop.f32.mrf.mxu0
        %v1133 = vadd.f32 %v964, %v1132
        %v1134 = vpop.f32.mrf.mxu0
        %v1135 = vadd.f32 %v966, %v1134
        %1136 = vmatmul.bf16.gmra.mxu0 %v673
        %v1137 = vpop.f32.mrf.mxu0
        %v1138 = vadd.f32 %v969, %v1137
        %v1139 = vpop.f32.mrf.mxu0
        %v1140 = vadd.f32 %v971, %v1139
        %1141 = vmatmul.bf16.gmra.mxu0 %v675
        %v1142 = vpop.f32.mrf.mxu0
        %v1143 = vadd.f32 %v974, %v1142
        %v1144 = vpop.f32.mrf.mxu0
        %v1145 = vadd.f32 %v976, %v1144
        %1146 = vmatmul.bf16.gmra.mxu0 %v677
        %v1147 = vpop.f32.mrf.mxu0
        %v1148 = vadd.f32 %v979, %v1147
        %v1149 = vpop.f32.mrf.mxu0
        %v1150 = vadd.f32 %v981, %v1149
        %1151 = vmatmul.bf16.gmra.mxu0 %v679
        %v1152 = vpop.f32.mrf.mxu0
        %v1153 = vadd.f32 %v984, %v1152
        %v1154 = vpop.f32.mrf.mxu0
        %v1155 = vadd.f32 %v986, %v1154
        %1156 = vmatmul.bf16.gmra.mxu0 %v681
        %v1157 = vpop.f32.mrf.mxu0
        %v1158 = vadd.f32 %v989, %v1157
        %v1159 = vpop.f32.mrf.mxu0
        %v1160 = vadd.f32 %v991, %v1159
        %1161 = vmatmul.bf16.gmra.mxu0 %v683
        %v1162 = vpop.f32.mrf.mxu0
        %v1163 = vadd.f32 %v994, %v1162
        %v1164 = vpop.f32.mrf.mxu0
        %v1165 = vadd.f32 %v996, %v1164
        %1166 = vmatmul.bf16.gmra.mxu0 %v685
        %v1167 = vpop.f32.mrf.mxu0
        %v1168 = vadd.f32 %v999, %v1167
        %v1169 = vpop.f32.mrf.mxu0
        %v1170 = vadd.f32 %v1001, %v1169
        %1171 = vmatmul.bf16.gmra.mxu0 %v687
        %v1172 = vpop.f32.mrf.mxu0
        %v1173 = vadd.f32 %v1004, %v1172
        %v1174 = vpop.f32.mrf.mxu0
        %v1175 = vadd.f32 %v1006, %v1174
        %1176 = vmatmul.bf16.gmra.mxu0 %v689
        %v1177 = vpop.f32.mrf.mxu0
        %v1178 = vadd.f32 %v1009, %v1177
        %v1179 = vpop.f32.mrf.mxu0
        %v1180 = vadd.f32 %v1011, %v1179
        %1181 = vmatmul.bf16.gmra.mxu0 %v691
        %v1182 = vpop.f32.mrf.mxu0
        %v1183 = vadd.f32 %v1014, %v1182
        %v1184 = vpop.f32.mrf.mxu0
        %v1185 = vadd.f32 %v1016, %v1184
        %1186 = vmatmul.bf16.gmra.mxu0 %v693
        %v1187 = vpop.f32.mrf.mxu0
        %v1188 = vadd.f32 %v1019, %v1187
        %v1189 = vpop.f32.mrf.mxu0
        %v1190 = vadd.f32 %v1021, %v1189
        %1191 = vdwg.mxu0
        %v1192 = vld [vmem:[%s329] sm:$0x1]
        %v1194 = vperm.slane %v1192, 0
        %v1196 = vmul.f32 %v1033, %v1194
        %v1197 = vmul.f32 %v1035, %v1194
        %v1198 = vmul.f32 %v1038, %v1194
        %v1199 = vmul.f32 %v1040, %v1194
        %v1200 = vmul.f32 %v1043, %v1194
        %v1201 = vmul.f32 %v1045, %v1194
        %v1202 = vmul.f32 %v1048, %v1194
        %v1203 = vmul.f32 %v1050, %v1194
        %v1204 = vmul.f32 %v1053, %v1194
        %v1205 = vmul.f32 %v1055, %v1194
        %v1206 = vmul.f32 %v1058, %v1194
        %v1207 = vmul.f32 %v1060, %v1194
        %v1208 = vmul.f32 %v1063, %v1194
        %v1209 = vmul.f32 %v1065, %v1194
        %v1210 = vmul.f32 %v1068, %v1194
        %v1211 = vmul.f32 %v1070, %v1194
        %v1212 = vmul.f32 %v1073, %v1194
        %v1213 = vmul.f32 %v1075, %v1194
        %v1214 = vmul.f32 %v1078, %v1194
        %v1215 = vmul.f32 %v1080, %v1194
        %v1216 = vmul.f32 %v1083, %v1194
        %v1217 = vmul.f32 %v1085, %v1194
        %v1218 = vmul.f32 %v1088, %v1194
        %v1219 = vmul.f32 %v1090, %v1194
        %v1220 = vmul.f32 %v1093, %v1194
        %v1221 = vmul.f32 %v1095, %v1194
        %v1222 = vmul.f32 %v1098, %v1194
        %v1223 = vmul.f32 %v1100, %v1194
        %v1224 = vmul.f32 %v1103, %v1194
        %v1225 = vmul.f32 %v1105, %v1194
        %v1226 = vmul.f32 %v1108, %v1194
        %v1227 = vmul.f32 %v1110, %v1194
        %v1228 = vmul.f32 %v1113, %v1194
        %v1229 = vmul.f32 %v1115, %v1194
        %v1230 = vmul.f32 %v1118, %v1194
        %v1231 = vmul.f32 %v1120, %v1194
        %v1232 = vmul.f32 %v1123, %v1194
        %v1233 = vmul.f32 %v1125, %v1194
        %v1234 = vmul.f32 %v1128, %v1194
        %v1235 = vmul.f32 %v1130, %v1194
        %v1236 = vmul.f32 %v1133, %v1194
        %v1237 = vmul.f32 %v1135, %v1194
        %v1238 = vmul.f32 %v1138, %v1194
        %v1239 = vmul.f32 %v1140, %v1194
        %v1240 = vmul.f32 %v1143, %v1194
        %v1241 = vmul.f32 %v1145, %v1194
        %v1242 = vmul.f32 %v1148, %v1194
        %v1243 = vmul.f32 %v1150, %v1194
        %v1244 = vmul.f32 %v1153, %v1194
        %v1245 = vmul.f32 %v1155, %v1194
        %v1246 = vmul.f32 %v1158, %v1194
        %v1247 = vmul.f32 %v1160, %v1194
        %v1248 = vmul.f32 %v1163, %v1194
        %v1249 = vmul.f32 %v1165, %v1194
        %v1250 = vmul.f32 %v1168, %v1194
        %v1251 = vmul.f32 %v1170, %v1194
        %v1252 = vmul.f32 %v1173, %v1194
        %v1253 = vmul.f32 %v1175, %v1194
        %v1254 = vmul.f32 %v1178, %v1194
        %v1255 = vmul.f32 %v1180, %v1194
        %v1256 = vmul.f32 %v1183, %v1194
        %v1257 = vmul.f32 %v1185, %v1194
        %v1258 = vmul.f32 %v1188, %v1194
        %v1259 = vmul.f32 %v1190, %v1194
        %v1260 = vld [vmem:[%s332] sm:$0x1]
        %v1262 = vperm.slane %v1260, 0
        %v1264 = vadd.f32 %v1196, %v1262
        %v1265 = vadd.f32 %v1197, %v1262
        %v1266 = vadd.f32 %v1198, %v1262
        %v1267 = vadd.f32 %v1199, %v1262
        %v1268 = vadd.f32 %v1200, %v1262
        %v1269 = vadd.f32 %v1201, %v1262
        %v1270 = vadd.f32 %v1202, %v1262
        %v1271 = vadd.f32 %v1203, %v1262
        %v1272 = vadd.f32 %v1204, %v1262
        %v1273 = vadd.f32 %v1205, %v1262
        %v1274 = vadd.f32 %v1206, %v1262
        %v1275 = vadd.f32 %v1207, %v1262
        %v1276 = vadd.f32 %v1208, %v1262
        %v1277 = vadd.f32 %v1209, %v1262
        %v1278 = vadd.f32 %v1210, %v1262
        %v1279 = vadd.f32 %v1211, %v1262
        %v1280 = vadd.f32 %v1212, %v1262
        %v1281 = vadd.f32 %v1213, %v1262
        %v1282 = vadd.f32 %v1214, %v1262
        %v1283 = vadd.f32 %v1215, %v1262
        %v1284 = vadd.f32 %v1216, %v1262
        %v1285 = vadd.f32 %v1217, %v1262
        %v1286 = vadd.f32 %v1218, %v1262
        %v1287 = vadd.f32 %v1219, %v1262
        %v1288 = vadd.f32 %v1220, %v1262
        %v1289 = vadd.f32 %v1221, %v1262
        %v1290 = vadd.f32 %v1222, %v1262
        %v1291 = vadd.f32 %v1223, %v1262
        %v1292 = vadd.f32 %v1224, %v1262
        %v1293 = vadd.f32 %v1225, %v1262
        %v1294 = vadd.f32 %v1226, %v1262
        %v1295 = vadd.f32 %v1227, %v1262
        %v1296 = vadd.f32 %v1228, %v1262
        %v1297 = vadd.f32 %v1229, %v1262
        %v1298 = vadd.f32 %v1230, %v1262
        %v1299 = vadd.f32 %v1231, %v1262
        %v1300 = vadd.f32 %v1232, %v1262
        %v1301 = vadd.f32 %v1233, %v1262
        %v1302 = vadd.f32 %v1234, %v1262
        %v1303 = vadd.f32 %v1235, %v1262
        %v1304 = vadd.f32 %v1236, %v1262
        %v1305 = vadd.f32 %v1237, %v1262
        %v1306 = vadd.f32 %v1238, %v1262
        %v1307 = vadd.f32 %v1239, %v1262
        %v1308 = vadd.f32 %v1240, %v1262
        %v1309 = vadd.f32 %v1241, %v1262
        %v1310 = vadd.f32 %v1242, %v1262
        %v1311 = vadd.f32 %v1243, %v1262
        %v1312 = vadd.f32 %v1244, %v1262
        %v1313 = vadd.f32 %v1245, %v1262
        %v1314 = vadd.f32 %v1246, %v1262
        %v1315 = vadd.f32 %v1247, %v1262
        %v1316 = vadd.f32 %v1248, %v1262
        %v1317 = vadd.f32 %v1249, %v1262
        %v1318 = vadd.f32 %v1250, %v1262
        %v1319 = vadd.f32 %v1251, %v1262
        %v1320 = vadd.f32 %v1252, %v1262
        %v1321 = vadd.f32 %v1253, %v1262
        %v1322 = vadd.f32 %v1254, %v1262
        %v1323 = vadd.f32 %v1255, %v1262
        %v1324 = vadd.f32 %v1256, %v1262
        %v1325 = vadd.f32 %v1257, %v1262
        %v1326 = vadd.f32 %v1258, %v1262
        %v1327 = vadd.f32 %v1259, %v1262
        %v1328 = vmax.f32 %v1264, 0.0
        %v1329 = vmax.f32 %v1265, 0.0
        %v1330 = vmax.f32 %v1266, 0.0
        %v1331 = vmax.f32 %v1267, 0.0
        %v1332 = vmax.f32 %v1268, 0.0
        %v1333 = vmax.f32 %v1269, 0.0
        %v1334 = vmax.f32 %v1270, 0.0
        %v1335 = vmax.f32 %v1271, 0.0
        %v1336 = vmax.f32 %v1272, 0.0
        %v1337 = vmax.f32 %v1273, 0.0
        %v1338 = vmax.f32 %v1274, 0.0
        %v1339 = vmax.f32 %v1275, 0.0
        %v1340 = vmax.f32 %v1276, 0.0
        %v1341 = vmax.f32 %v1277, 0.0
        %v1342 = vmax.f32 %v1278, 0.0
        %v1343 = vmax.f32 %v1279, 0.0
        %v1344 = vmax.f32 %v1280, 0.0
        %v1345 = vmax.f32 %v1281, 0.0
        %v1346 = vmax.f32 %v1282, 0.0
        %v1347 = vmax.f32 %v1283, 0.0
        %v1348 = vmax.f32 %v1284, 0.0
        %v1349 = vmax.f32 %v1285, 0.0
        %v1350 = vmax.f32 %v1286, 0.0
        %v1351 = vmax.f32 %v1287, 0.0
        %v1352 = vmax.f32 %v1288, 0.0
        %v1353 = vmax.f32 %v1289, 0.0
        %v1354 = vmax.f32 %v1290, 0.0
        %v1355 = vmax.f32 %v1291, 0.0
        %v1356 = vmax.f32 %v1292, 0.0
        %v1357 = vmax.f32 %v1293, 0.0
        %v1358 = vmax.f32 %v1294, 0.0
        %v1359 = vmax.f32 %v1295, 0.0
        %v1360 = vmax.f32 %v1296, 0.0
        %v1361 = vmax.f32 %v1297, 0.0
        %v1362 = vmax.f32 %v1298, 0.0
        %v1363 = vmax.f32 %v1299, 0.0
        %v1364 = vmax.f32 %v1300, 0.0
        %v1365 = vmax.f32 %v1301, 0.0
        %v1366 = vmax.f32 %v1302, 0.0
        %v1367 = vmax.f32 %v1303, 0.0
        %v1368 = vmax.f32 %v1304, 0.0
        %v1369 = vmax.f32 %v1305, 0.0
        %v1370 = vmax.f32 %v1306, 0.0
        %v1371 = vmax.f32 %v1307, 0.0
        %v1372 = vmax.f32 %v1308, 0.0
        %v1373 = vmax.f32 %v1309, 0.0
        %v1374 = vmax.f32 %v1310, 0.0
        %v1375 = vmax.f32 %v1311, 0.0
        %v1376 = vmax.f32 %v1312, 0.0
        %v1377 = vmax.f32 %v1313, 0.0
        %v1378 = vmax.f32 %v1314, 0.0
        %v1379 = vmax.f32 %v1315, 0.0
        %v1380 = vmax.f32 %v1316, 0.0
        %v1381 = vmax.f32 %v1317, 0.0
        %v1382 = vmax.f32 %v1318, 0.0
        %v1383 = vmax.f32 %v1319, 0.0
        %v1384 = vmax.f32 %v1320, 0.0
        %v1385 = vmax.f32 %v1321, 0.0
        %v1386 = vmax.f32 %v1322, 0.0
        %v1387 = vmax.f32 %v1323, 0.0
        %v1388 = vmax.f32 %v1324, 0.0
        %v1389 = vmax.f32 %v1325, 0.0
        %v1390 = vmax.f32 %v1326, 0.0
        %v1391 = vmax.f32 %v1327, 0.0
        %v1392 = vpack.c.bf16 %v1328, %v1328
        %v1393 = vpack.c.bf16 %v1329, %v1329
        %v1394 = vpack.c.bf16 %v1330, %v1330
        %v1395 = vpack.c.bf16 %v1331, %v1331
        %v1396 = vpack.c.bf16 %v1332, %v1332
        %v1397 = vpack.c.bf16 %v1333, %v1333
        %v1398 = vpack.c.bf16 %v1334, %v1334
        %v1399 = vpack.c.bf16 %v1335, %v1335
        %v1400 = vpack.c.bf16 %v1336, %v1336
        %v1401 = vpack.c.bf16 %v1337, %v1337
        %v1402 = vpack.c.bf16 %v1338, %v1338
        %v1403 = vpack.c.bf16 %v1339, %v1339
        %v1404 = vpack.c.bf16 %v1340, %v1340
        %v1405 = vpack.c.bf16 %v1341, %v1341
        %v1406 = vpack.c.bf16 %v1342, %v1342
        %v1407 = vpack.c.bf16 %v1343, %v1343
        %v1408 = vpack.c.bf16 %v1344, %v1344
        %v1409 = vpack.c.bf16 %v1345, %v1345
        %v1410 = vpack.c.bf16 %v1346, %v1346
        %v1411 = vpack.c.bf16 %v1347, %v1347
        %v1412 = vpack.c.bf16 %v1348, %v1348
        %v1413 = vpack.c.bf16 %v1349, %v1349
        %v1414 = vpack.c.bf16 %v1350, %v1350
        %v1415 = vpack.c.bf16 %v1351, %v1351
        %v1416 = vpack.c.bf16 %v1352, %v1352
        %v1417 = vpack.c.bf16 %v1353, %v1353
        %v1418 = vpack.c.bf16 %v1354, %v1354
        %v1419 = vpack.c.bf16 %v1355, %v1355
        %v1420 = vpack.c.bf16 %v1356, %v1356
        %v1421 = vpack.c.bf16 %v1357, %v1357
        %v1422 = vpack.c.bf16 %v1358, %v1358
        %v1423 = vpack.c.bf16 %v1359, %v1359
        %v1424 = vpack.c.bf16 %v1360, %v1360
        %v1425 = vpack.c.bf16 %v1361, %v1361
        %v1426 = vpack.c.bf16 %v1362, %v1362
        %v1427 = vpack.c.bf16 %v1363, %v1363
        %v1428 = vpack.c.bf16 %v1364, %v1364
        %v1429 = vpack.c.bf16 %v1365, %v1365
        %v1430 = vpack.c.bf16 %v1366, %v1366
        %v1431 = vpack.c.bf16 %v1367, %v1367
        %v1432 = vpack.c.bf16 %v1368, %v1368
        %v1433 = vpack.c.bf16 %v1369, %v1369
        %v1434 = vpack.c.bf16 %v1370, %v1370
        %v1435 = vpack.c.bf16 %v1371, %v1371
        %v1436 = vpack.c.bf16 %v1372, %v1372
        %v1437 = vpack.c.bf16 %v1373, %v1373
        %v1438 = vpack.c.bf16 %v1374, %v1374
        %v1439 = vpack.c.bf16 %v1375, %v1375
        %v1440 = vpack.c.bf16 %v1376, %v1376
        %v1441 = vpack.c.bf16 %v1377, %v1377
        %v1442 = vpack.c.bf16 %v1378, %v1378
        %v1443 = vpack.c.bf16 %v1379, %v1379
        %v1444 = vpack.c.bf16 %v1380, %v1380
        %v1445 = vpack.c.bf16 %v1381, %v1381
        %v1446 = vpack.c.bf16 %v1382, %v1382
        %v1447 = vpack.c.bf16 %v1383, %v1383
        %v1448 = vpack.c.bf16 %v1384, %v1384
        %v1449 = vpack.c.bf16 %v1385, %v1385
        %v1450 = vpack.c.bf16 %v1386, %v1386
        %v1451 = vpack.c.bf16 %v1387, %v1387
        %v1452 = vpack.c.bf16 %v1388, %v1388
        %v1453 = vpack.c.bf16 %v1389, %v1389
        %v1454 = vpack.c.bf16 %v1390, %v1390
        %v1455 = vpack.c.bf16 %v1391, %v1391
        %vm1456 = vcmask 519168
        %1457 = vst.msk [vmem:[%s340] sm:$0xf] %vm1456, %v1392
        %1458 = vst.msk [vmem:[%s340 + $0x4] sm:$0xf] %vm1456, %v1393
        %1459 = vst.msk [vmem:[%s340 + $0x8] sm:$0xf] %vm1456, %v1394
        %1460 = vst.msk [vmem:[%s340 + $0xc] sm:$0xf] %vm1456, %v1395
        %1461 = vst.msk [vmem:[%s340 + $0x10] sm:$0xf] %vm1456, %v1396
        %1462 = vst.msk [vmem:[%s340 + $0x14] sm:$0xf] %vm1456, %v1397
        %1463 = vst.msk [vmem:[%s340 + $0x18] sm:$0xf] %vm1456, %v1398
        %1464 = vst.msk [vmem:[%s340 + $0x1c] sm:$0xf] %vm1456, %v1399
        %1465 = vst.msk [vmem:[%s340 + $0x20] sm:$0xf] %vm1456, %v1400
        %1466 = vst.msk [vmem:[%s340 + $0x24] sm:$0xf] %vm1456, %v1401
        %1467 = vst.msk [vmem:[%s340 + $0x28] sm:$0xf] %vm1456, %v1402
        %1468 = vst.msk [vmem:[%s340 + $0x2c] sm:$0xf] %vm1456, %v1403
        %1469 = vst.msk [vmem:[%s340 + $0x30] sm:$0xf] %vm1456, %v1404
        %1470 = vst.msk [vmem:[%s340 + $0x34] sm:$0xf] %vm1456, %v1405
        %1471 = vst.msk [vmem:[%s340 + $0x38] sm:$0xf] %vm1456, %v1406
        %1472 = vst.msk [vmem:[%s340 + $0x3c] sm:$0xf] %vm1456, %v1407
        %1473 = vst.msk [vmem:[%s340 + $0x40] sm:$0xf] %vm1456, %v1408
        %1474 = vst.msk [vmem:[%s340 + $0x44] sm:$0xf] %vm1456, %v1409
        %1475 = vst.msk [vmem:[%s340 + $0x48] sm:$0xf] %vm1456, %v1410
        %1476 = vst.msk [vmem:[%s340 + $0x4c] sm:$0xf] %vm1456, %v1411
        %1477 = vst.msk [vmem:[%s340 + $0x50] sm:$0xf] %vm1456, %v1412
        %1478 = vst.msk [vmem:[%s340 + $0x54] sm:$0xf] %vm1456, %v1413
        %1479 = vst.msk [vmem:[%s340 + $0x58] sm:$0xf] %vm1456, %v1414
        %1480 = vst.msk [vmem:[%s340 + $0x5c] sm:$0xf] %vm1456, %v1415
        %1481 = vst.msk [vmem:[%s340 + $0x60] sm:$0xf] %vm1456, %v1416
        %1482 = vst.msk [vmem:[%s340 + $0x64] sm:$0xf] %vm1456, %v1417
        %1483 = vst.msk [vmem:[%s340 + $0x68] sm:$0xf] %vm1456, %v1418
        %1484 = vst.msk [vmem:[%s340 + $0x6c] sm:$0xf] %vm1456, %v1419
        %1485 = vst.msk [vmem:[%s340 + $0x70] sm:$0xf] %vm1456, %v1420
        %1486 = vst.msk [vmem:[%s340 + $0x74] sm:$0xf] %vm1456, %v1421
        %1487 = vst.msk [vmem:[%s340 + $0x78] sm:$0xf] %vm1456, %v1422
        %1488 = vst.msk [vmem:[%s340 + $0x7c] sm:$0xf] %vm1456, %v1423
        %1489 = vst.msk [vmem:[%s340 + $0x80] sm:$0xf] %vm1456, %v1424
        %1490 = vst.msk [vmem:[%s340 + $0x84] sm:$0xf] %vm1456, %v1425
        %1491 = vst.msk [vmem:[%s340 + $0x88] sm:$0xf] %vm1456, %v1426
        %1492 = vst.msk [vmem:[%s340 + $0x8c] sm:$0xf] %vm1456, %v1427
        %1493 = vst.msk [vmem:[%s340 + $0x90] sm:$0xf] %vm1456, %v1428
        %1494 = vst.msk [vmem:[%s340 + $0x94] sm:$0xf] %vm1456, %v1429
        %1495 = vst.msk [vmem:[%s340 + $0x98] sm:$0xf] %vm1456, %v1430
        %1496 = vst.msk [vmem:[%s340 + $0x9c] sm:$0xf] %vm1456, %v1431
        %1497 = vst.msk [vmem:[%s340 + $0xa0] sm:$0xf] %vm1456, %v1432
        %1498 = vst.msk [vmem:[%s340 + $0xa4] sm:$0xf] %vm1456, %v1433
        %1499 = vst.msk [vmem:[%s340 + $0xa8] sm:$0xf] %vm1456, %v1434
        %1500 = vst.msk [vmem:[%s340 + $0xac] sm:$0xf] %vm1456, %v1435
        %1501 = vst.msk [vmem:[%s340 + $0xb0] sm:$0xf] %vm1456, %v1436
        %1502 = vst.msk [vmem:[%s340 + $0xb4] sm:$0xf] %vm1456, %v1437
        %1503 = vst.msk [vmem:[%s340 + $0xb8] sm:$0xf] %vm1456, %v1438
        %1504 = vst.msk [vmem:[%s340 + $0xbc] sm:$0xf] %vm1456, %v1439
        %1505 = vst.msk [vmem:[%s340 + $0xc0] sm:$0xf] %vm1456, %v1440
        %1506 = vst.msk [vmem:[%s340 + $0xc4] sm:$0xf] %vm1456, %v1441
        %1507 = vst.msk [vmem:[%s340 + $0xc8] sm:$0xf] %vm1456, %v1442
        %1508 = vst.msk [vmem:[%s340 + $0xcc] sm:$0xf] %vm1456, %v1443
        %1509 = vst.msk [vmem:[%s340 + $0xd0] sm:$0xf] %vm1456, %v1444
        %1510 = vst.msk [vmem:[%s340 + $0xd4] sm:$0xf] %vm1456, %v1445
        %1511 = vst.msk [vmem:[%s340 + $0xd8] sm:$0xf] %vm1456, %v1446
        %1512 = vst.msk [vmem:[%s340 + $0xdc] sm:$0xf] %vm1456, %v1447
        %1513 = vst.msk [vmem:[%s340 + $0xe0] sm:$0xf] %vm1456, %v1448
        %1514 = vst.msk [vmem:[%s340 + $0xe4] sm:$0xf] %vm1456, %v1449
        %1515 = vst.msk [vmem:[%s340 + $0xe8] sm:$0xf] %vm1456, %v1450
        %1516 = vst.msk [vmem:[%s340 + $0xec] sm:$0xf] %vm1456, %v1451
        %1517 = vst.msk [vmem:[%s340 + $0xf0] sm:$0xf] %vm1456, %v1452
        %1518 = vst.msk [vmem:[%s340 + $0xf4] sm:$0xf] %vm1456, %v1453
        %1519 = vst.msk [vmem:[%s340 + $0xf8] sm:$0xf] %vm1456, %v1454
        %1520 = vst.msk [vmem:[%s340 + $0xfc] sm:$0xf] %vm1456, %v1455
        %s1521 = smul.u32 64, %s24
        %p1522 = scmp.lt.s32.totalorder %s1521, 255
        %s1523 = scalar_select %p1522, %s1521, 255
        %p1524 = scmp.lt.s32.totalorder %s25, 0
        %s1525 = scalar_select %p1524, %s25, 0
        %s1526 = sadd.s32 %s1525, %s1523
        %s1527 = smul.addr %s1526, 4
        %s1528 = scalar_lea.vmem %s6, %s1527
        // Predicated region
        $region49: #{_fused_matmul.1} parent=43 // pred_check
          %p1529 = pneg %p198
        $region50: #{_fused_matmul.1} parent=43 // pred_check_branch
          %1531 = sbr.rel (%p1529) target = $region52
        $region51: #{_fused_matmul.1} parent=43 // pred_region
          %s1532 = smul.u32 64, %s24
        $region52: #{_fused_matmul.1} parent=43 // pred_fallthru
          _
      $region44: #{_fused_matmul.1} parent=5 // pred_fallthru
        _
      %p1533 = scmp.le.s32.totalorder 2, %s15
      // Predicated region
      $region53: #{_fused_matmul.1} parent=5 // pred_check
        %p1534 = pneg %p1533
      $region54: #{_fused_matmul.1} parent=5 // pred_check_branch
        %1536 = sbr.rel (%p1534) target = $region56
      $region55: #{_fused_matmul.1} parent=5 // pred_region
        %s1537 = ssub.s32 %s15, 2
        // Predicated region
        $region57: #{_fused_matmul.1} parent=55 // pred_check
          %p1538 = pneg %p204
        $region58: #{_fused_matmul.1} parent=55 // pred_check_branch
          %1540 = sbr.rel (%p1538) target = $region60
        $region59: #{_fused_matmul.1} parent=55 // pred_region
          %s1541 = smul.u32 64, %s26
          %p1542 = scmp.lt.s32.totalorder %s1541, 255
          %s1543 = scalar_select %p1542, %s1541, 255
          %p1544 = scmp.lt.s32.totalorder %s27, 0
          %s1545 = scalar_select %p1544, %s27, 0
          %s1546 = sadd.s32 %s1545, %s1543
          %s1547 = smul.addr %s1546, 4
          %s1548 = scalar_lea.vmem %s6, %s1547
        $region60: #{_fused_matmul.1} parent=55 // pred_fallthru
          _
      $region56: #{_fused_matmul.1} parent=5 // pred_fallthru
        _
    $region6: #{_fused_matmul.1} parent=1 // loop_footer
      %s19 = sadd.s32 1, %s15
    $region7: #{_fused_matmul.1} parent=1 // loop_footer_branch
      %14 = sbr.rel target = $region3
    $region8: #{_fused_matmul.1} parent=1 // loop_exit
      _
    %1549 = vsyncpa [#allocation3], 1
    %s1550 = scalar_lea.sflag [#allocation3], 1
    %1551 = vsyncpa %s1550, 1

</llo_original>
